<compile_context>
chip_gen: v7x
topology: tpu7x:2x2x1
jax: 0.10.0
libtpu: 0.0.40
codegen_flags: <defaults>
</compile_context>

<pallas_src>
import functools
import math

import jax
import jax.numpy as jnp
import numpy as np
from jax.experimental import pallas as pl
from jax.experimental.pallas import tpu as pltpu


def _bilinear_weight_matrix(in_size: int, out_size: int) -> np.ndarray:
    """(out_size, in_size) dense bilinear weights, torch align_corners=False semantics
    (half-pixel centers, negative source coords clamped to 0)."""
    scale = in_size / out_size
    w = np.zeros((out_size, in_size), dtype=np.float32)
    for d in range(out_size):
        src = max((d + 0.5) * scale - 0.5, 0.0)
        x0 = min(int(math.floor(src)), in_size - 1)
        x1 = min(x0 + 1, in_size - 1)
        f = src - x0
        w[d, x0] += 1.0 - f
        w[d, x1] += f
    return w


def _axis_lerp_params(in_size: int, out_size: int):
    """Compile-time 2-tap lerp tables (lo_idx, hi_idx, frac) for one axis."""
    scale = in_size / out_size
    lo, hi, frac = [], [], []
    for d in range(out_size):
        src = max((d + 0.5) * scale - 0.5, 0.0)
        x0 = min(int(math.floor(src)), in_size - 1)
        x1 = min(x0 + 1, in_size - 1)
        lo.append(x0)
        hi.append(x1)
        frac.append(float(src - x0))
    return tuple(lo), tuple(hi), tuple(frac)


def _choose_tb(b, h_in, w_in, h_out, w_out, itemsize):
    """Planes per grid step: big enough to amortize per-step overhead, small enough for
    double-buffered VMEM on every chip (v7x has only 64 MiB physical / 32 MiB scoped)."""
    budget = 8 * 1024 * 1024                      # bytes for one in+out block set
    per_plane = (h_in * w_in + h_out * w_out) * itemsize
    tb = max(1, budget // (2 * per_plane))        # 2x for double buffering
    tb = min(tb, 256, b)
    if b > 1:
        tb = min(tb, -(-b // 2))                  # keep >= 2 grid steps (v7x: 2 TCs)
    if tb >= 8:
        tb = (tb // 8) * 8                        # sublane-aligned leading block dim
    return max(int(tb), 1)


def _resize_kernel(x_ref, wwt_ref, o_ref, *, h_lo, h_hi, h_frac, compute_dtype):
    # x_ref: (TB, H_in, W_in); wwt_ref: (W_in, W_out) pre-transposed; o_ref: (TB, H_out, W_out)
    ww = wwt_ref[...]                             # loaded once, stays in vregs
    for ho in range(len(h_lo)):                   # static unroll (small H_out)
        i0, i1, f = h_lo[ho], h_hi[ho], h_frac[ho]
        r0 = x_ref[:, i0, :].astype(jnp.float32)  # (TB, W_in)
        if f != 0.0 and i1 != i0:                 # static branch; skip zero-weight tap
            r1 = x_ref[:, i1, :].astype(jnp.float32)
            row = r0 * (1.0 - f) + r1 * f         # H-axis 2-tap lerp on the VPU
        else:
            row = r0
        out_row = jnp.dot(row.astype(compute_dtype), ww,
                          preferred_element_type=jnp.float32)   # (TB, W_out) on MXU
        o_ref[:, ho, :] = out_row.astype(o_ref.dtype)


def _bilinear_resize_planes(planes, h_out, w_out):
    """planes: (B, H_in, W_in) -> (B, H_out, W_out), bilinear align_corners=False."""
    b, h_in, w_in = planes.shape
    dtype = planes.dtype
    itemsize = jnp.dtype(dtype).itemsize
    # bf16 MXU operand path on bf16 inputs (f32 accumulation via preferred_element_type).
    compute_dtype = jnp.bfloat16 if dtype == jnp.bfloat16 else jnp.float32

    wwt = jnp.asarray(_bilinear_weight_matrix(w_in, w_out).T, dtype=compute_dtype)
    h_lo, h_hi, h_frac = _axis_lerp_params(h_in, h_out)

    tb = _choose_tb(b, h_in, w_in, h_out, w_out, itemsize)
    nb = -(-b // tb)
    b_pad = nb * tb
    if b_pad != b:
        planes = jnp.pad(planes, ((0, b_pad - b), (0, 0), (0, 0)))

    kernel = functools.partial(_resize_kernel, h_lo=h_lo, h_hi=h_hi,
                               h_frac=h_frac, compute_dtype=compute_dtype)

    flops = b_pad * h_out * (2 * w_in * w_out + 3 * w_in)
    bytes_accessed = (b_pad * (h_in * w_in + h_out * w_out) * itemsize
                      + w_in * w_out * jnp.dtype(compute_dtype).itemsize)

    out = pl.pallas_call(
        kernel,
        out_shape=jax.ShapeDtypeStruct((b_pad, h_out, w_out), dtype),
        grid_spec=pltpu.PrefetchScalarGridSpec(
            num_scalar_prefetch=0,
            grid=(nb,),
            in_specs=[
                pl.BlockSpec((tb, h_in, w_in), lambda i: (i, 0, 0)),
                pl.BlockSpec((w_in, w_out), lambda i: (0, 0)),
            ],
            out_specs=pl.BlockSpec((tb, h_out, w_out), lambda i: (i, 0, 0)),
        ),
        compiler_params=pltpu.CompilerParams(
            dimension_semantics=("parallel",),
            vmem_limit_bytes=32 * 1024 * 1024,
        ),
        cost_estimate=pl.CostEstimate(
            flops=flops, transcendentals=0, bytes_accessed=bytes_accessed),
    )(planes, wwt)

    return out[:b] if b_pad != b else out


@functools.partial(jax.jit, static_argnums=(1,))
def bilinear_resize_nchw(x, sizes):
    """F.interpolate(x, sizes, mode='bilinear', align_corners=False) for NCHW x."""
    n, c, h_in, w_in = x.shape
    h_out, w_out = int(sizes[0]), int(sizes[1])
    out = _bilinear_resize_planes(x.reshape(n * c, h_in, w_in), h_out, w_out)
    return out.reshape(n, c, h_out, w_out)


@functools.partial(jax.jit, static_argnums=(1,))
def up_or_down_sampling_effect(x, sizes, *param_tensors):
    """Mirrors UpOrDownSamplingEffect.forward (bilinear, align_corners=False)."""
    h_out, w_out = int(sizes[0]), int(sizes[1])

    # Fuse x and every compatible 4-D param tensor into one pallas_call per signature.
    work = [("x", x)]
    for idx, p in enumerate(param_tensors):
        if p.ndim == 4:
            work.append((idx, p))

    groups = {}
    for key, t in work:
        sig = (t.shape[2], t.shape[3], jnp.dtype(t.dtype))
        groups.setdefault(sig, []).append((key, t))

    resized = {}
    for (h_in, w_in, _), items in groups.items():
        flats = [t.reshape(-1, h_in, w_in) for _, t in items]
        fused = flats[0] if len(flats) == 1 else jnp.concatenate(flats, axis=0)
        out = _bilinear_resize_planes(fused, h_out, w_out)
        off = 0
        for (key, t), flat in zip(items, flats):
            cnt = flat.shape[0]
            resized[key] = out[off:off + cnt].reshape(
                t.shape[0], t.shape[1], h_out, w_out)
            off += cnt

    tex = resized["x"]
    param_result = [resized[i] if p.ndim == 4 else p
                    for i, p in enumerate(param_tensors)]
    if len(param_result) == 1:
        return (tex, param_result[0])
    if len(param_result) == 2:
        return (tex, param_result[0], param_result[1])
    if len(param_result) == 3:
        return (tex, param_result[0], param_result[1], param_result[2])
    return tex


if __name__ == "__main__":
    key = jax.random.PRNGKey(0)
    k1, k2, k3, k4 = jax.random.split(key, 4)

    # Downsample test: x + one 4-D param (fused into one pallas_call) + one passthrough.
    x = jax.random.normal(k1, (2, 4, 16, 16), dtype=jnp.float32)
    sizes = (8, 8)
    p4d = jax.random.normal(k2, (2, 4, 16, 16), dtype=jnp.float32)
    p1d = jax.random.normal(k3, (4,), dtype=jnp.float32)

    tex, p4_out, p1_out = up_or_down_sampling_effect(x, sizes, p4d, p1d)
    jax.block_until_ready((tex, p4_out, p1_out))

    assert tex.shape == (2, 4, 8, 8)
    assert p4_out.shape == (2, 4, 8, 8)
    assert p1_out.shape == (4,)

    wh = jnp.asarray(_bilinear_weight_matrix(16, 8))
    ww = jnp.asarray(_bilinear_weight_matrix(16, 8))
    ref_tex = jnp.einsum("oi,ncij,pj->ncop", wh, x, ww)
    ref_p4 = jnp.einsum("oi,ncij,pj->ncop", wh, p4d, ww)
    assert jnp.max(jnp.abs(ref_tex - tex)) < 1e-4
    assert jnp.max(jnp.abs(ref_p4 - p4_out)) < 1e-4
    assert bool(jnp.array_equal(p1_out, p1d))

    # Upsample test (no extra params -> bare tensor return, like the torch module).
    x2 = jax.random.normal(k4, (1, 2, 8, 8), dtype=jnp.float32)
    tex2 = up_or_down_sampling_effect(x2, (16, 12))
    tex2 = jax.block_until_ready(tex2)
    assert tex2.shape == (1, 2, 16, 12)
    wh2 = jnp.asarray(_bilinear_weight_matrix(8, 16))
    ww2 = jnp.asarray(_bilinear_weight_matrix(8, 12))
    ref2 = jnp.einsum("oi,ncij,pj->ncop", wh2, x2, ww2)
    assert jnp.max(jnp.abs(ref2 - tex2)) < 1e-4

    print("KERNEL_OK")
</pallas_src>

<mosaic_0001>
module attributes {stable_mosaic.version = 11 : i64} {
  func.func @_resize_kernel(%arg0: i32, %arg1: memref<8x16x16xf32, #tpu.memory_space<vmem>>, %arg2: memref<16x8xf32, #tpu.memory_space<vmem>>, %arg3: memref<8x8x8xf32, #tpu.memory_space<vmem>>) attributes {dimension_semantics = [#tpu.dimension_semantics<parallel>], iteration_bounds = array<i64: 2>, scalar_prefetch = 0 : i64, scratch_operands = 0 : i64, tpu.core_type = #tpu.core_type<tc>, window_params = [{transform_indices = @transform_0, window_bounds = array<i64: 8, 16, 16>}, {pipeline_mode = #tpu.pipeline_mode<synchronous>, transform_indices = @transform_1, window_bounds = array<i64: 16, 8>}, {transform_indices = @transform_2, window_bounds = array<i64: 8, 8, 8>}]} {
    %c0 = arith.constant 0 : index
    %c0_0 = arith.constant 0 : index
    %0 = vector.load %arg2[%c0, %c0_0] : memref<16x8xf32, #tpu.memory_space<vmem>>, vector<16x8xf32>
    %c0_1 = arith.constant 0 : index
    %c0_2 = arith.constant 0 : index
    %c0_3 = arith.constant 0 : index
    %1 = vector.load %arg1[%c0_1, %c0_2, %c0_3] : memref<8x16x16xf32, #tpu.memory_space<vmem>>, vector<8x1x16xf32>
    %2 = vector.shape_cast %1 : vector<8x1x16xf32> to vector<8x16xf32>
    %c0_4 = arith.constant 0 : index
    %c1 = arith.constant 1 : index
    %c0_5 = arith.constant 0 : index
    %3 = vector.load %arg1[%c0_4, %c1, %c0_5] : memref<8x16x16xf32, #tpu.memory_space<vmem>>, vector<8x1x16xf32>
    %4 = vector.shape_cast %3 : vector<8x1x16xf32> to vector<8x16xf32>
    %cst = arith.constant 5.000000e-01 : f32
    %5 = vector.broadcast %cst : f32 to vector<8x16xf32>
    %6 = arith.mulf %2, %5 : vector<8x16xf32>
    %cst_6 = arith.constant 5.000000e-01 : f32
    %7 = vector.broadcast %cst_6 : f32 to vector<8x16xf32>
    %8 = arith.mulf %4, %7 : vector<8x16xf32>
    %9 = arith.addf %6, %8 : vector<8x16xf32>
    %cst_7 = arith.constant dense<0.000000e+00> : vector<8x8xf32>
    %10 = tpu.matmul %9, %0, %cst_7 {dimension_numbers = #tpu.dot_dimension_numbers<[1], [0], [0], [1], [0, 0, 1, 1], [], []>} : vector<8x16xf32>, vector<16x8xf32>, vector<8x8xf32> -> vector<8x8xf32>
    %c0_8 = arith.constant 0 : index
    %c0_9 = arith.constant 0 : index
    %c0_10 = arith.constant 0 : index
    %11 = vector.load %arg3[%c0_8, %c0_9, %c0_10] : memref<8x8x8xf32, #tpu.memory_space<vmem>>, vector<8x1x8xf32>
    %12 = vector.shape_cast %11 : vector<8x1x8xf32> to vector<8x8xf32>
    %13 = vector.shape_cast %10 : vector<8x8xf32> to vector<8x1x8xf32>
    tpu.vector_store %arg3[%c0_8, %c0_9, %c0_10], %13 {strides = array<i32>} : memref<8x8x8xf32, #tpu.memory_space<vmem>>, vector<8x1x8xf32>,
    %c0_11 = arith.constant 0 : index
    %c2 = arith.constant 2 : index
    %c0_12 = arith.constant 0 : index
    %14 = vector.load %arg1[%c0_11, %c2, %c0_12] : memref<8x16x16xf32, #tpu.memory_space<vmem>>, vector<8x1x16xf32>
    %15 = vector.shape_cast %14 : vector<8x1x16xf32> to vector<8x16xf32>
    %c0_13 = arith.constant 0 : index
    %c3 = arith.constant 3 : index
    %c0_14 = arith.constant 0 : index
    %16 = vector.load %arg1[%c0_13, %c3, %c0_14] : memref<8x16x16xf32, #tpu.memory_space<vmem>>, vector<8x1x16xf32>
    %17 = vector.shape_cast %16 : vector<8x1x16xf32> to vector<8x16xf32>
    %cst_15 = arith.constant 5.000000e-01 : f32
    %18 = vector.broadcast %cst_15 : f32 to vector<8x16xf32>
    %19 = arith.mulf %15, %18 : vector<8x16xf32>
    %cst_16 = arith.constant 5.000000e-01 : f32
    %20 = vector.broadcast %cst_16 : f32 to vector<8x16xf32>
    %21 = arith.mulf %17, %20 : vector<8x16xf32>
    %22 = arith.addf %19, %21 : vector<8x16xf32>
    %cst_17 = arith.constant dense<0.000000e+00> : vector<8x8xf32>
    %23 = tpu.matmul %22, %0, %cst_17 {dimension_numbers = #tpu.dot_dimension_numbers<[1], [0], [0], [1], [0, 0, 1, 1], [], []>} : vector<8x16xf32>, vector<16x8xf32>, vector<8x8xf32> -> vector<8x8xf32>
    %c0_18 = arith.constant 0 : index
    %c1_19 = arith.constant 1 : index
    %c0_20 = arith.constant 0 : index
    %24 = vector.load %arg3[%c0_18, %c1_19, %c0_20] : memref<8x8x8xf32, #tpu.memory_space<vmem>>, vector<8x1x8xf32>
    %25 = vector.shape_cast %24 : vector<8x1x8xf32> to vector<8x8xf32>
    %26 = vector.shape_cast %23 : vector<8x8xf32> to vector<8x1x8xf32>
    tpu.vector_store %arg3[%c0_18, %c1_19, %c0_20], %26 {strides = array<i32>} : memref<8x8x8xf32, #tpu.memory_space<vmem>>, vector<8x1x8xf32>,
    %c0_21 = arith.constant 0 : index
    %c4 = arith.constant 4 : index
    %c0_22 = arith.constant 0 : index
    %27 = vector.load %arg1[%c0_21, %c4, %c0_22] : memref<8x16x16xf32, #tpu.memory_space<vmem>>, vector<8x1x16xf32>
    %28 = vector.shape_cast %27 : vector<8x1x16xf32> to vector<8x16xf32>
    %c0_23 = arith.constant 0 : index
    %c5 = arith.constant 5 : index
    %c0_24 = arith.constant 0 : index
    %29 = vector.load %arg1[%c0_23, %c5, %c0_24] : memref<8x16x16xf32, #tpu.memory_space<vmem>>, vector<8x1x16xf32>
    %30 = vector.shape_cast %29 : vector<8x1x16xf32> to vector<8x16xf32>
    %cst_25 = arith.constant 5.000000e-01 : f32
    %31 = vector.broadcast %cst_25 : f32 to vector<8x16xf32>
    %32 = arith.mulf %28, %31 : vector<8x16xf32>
    %cst_26 = arith.constant 5.000000e-01 : f32
    %33 = vector.broadcast %cst_26 : f32 to vector<8x16xf32>
    %34 = arith.mulf %30, %33 : vector<8x16xf32>
    %35 = arith.addf %32, %34 : vector<8x16xf32>
    %cst_27 = arith.constant dense<0.000000e+00> : vector<8x8xf32>
    %36 = tpu.matmul %35, %0, %cst_27 {dimension_numbers = #tpu.dot_dimension_numbers<[1], [0], [0], [1], [0, 0, 1, 1], [], []>} : vector<8x16xf32>, vector<16x8xf32>, vector<8x8xf32> -> vector<8x8xf32>
    %c0_28 = arith.constant 0 : index
    %c2_29 = arith.constant 2 : index
    %c0_30 = arith.constant 0 : index
    %37 = vector.load %arg3[%c0_28, %c2_29, %c0_30] : memref<8x8x8xf32, #tpu.memory_space<vmem>>, vector<8x1x8xf32>
    %38 = vector.shape_cast %37 : vector<8x1x8xf32> to vector<8x8xf32>
    %39 = vector.shape_cast %36 : vector<8x8xf32> to vector<8x1x8xf32>
    tpu.vector_store %arg3[%c0_28, %c2_29, %c0_30], %39 {strides = array<i32>} : memref<8x8x8xf32, #tpu.memory_space<vmem>>, vector<8x1x8xf32>,
    %c0_31 = arith.constant 0 : index
    %c6 = arith.constant 6 : index
    %c0_32 = arith.constant 0 : index
    %40 = vector.load %arg1[%c0_31, %c6, %c0_32] : memref<8x16x16xf32, #tpu.memory_space<vmem>>, vector<8x1x16xf32>
    %41 = vector.shape_cast %40 : vector<8x1x16xf32> to vector<8x16xf32>
    %c0_33 = arith.constant 0 : index
    %c7 = arith.constant 7 : index
    %c0_34 = arith.constant 0 : index
    %42 = vector.load %arg1[%c0_33, %c7, %c0_34] : memref<8x16x16xf32, #tpu.memory_space<vmem>>, vector<8x1x16xf32>
    %43 = vector.shape_cast %42 : vector<8x1x16xf32> to vector<8x16xf32>
    %cst_35 = arith.constant 5.000000e-01 : f32
    %44 = vector.broadcast %cst_35 : f32 to vector<8x16xf32>
    %45 = arith.mulf %41, %44 : vector<8x16xf32>
    %cst_36 = arith.constant 5.000000e-01 : f32
    %46 = vector.broadcast %cst_36 : f32 to vector<8x16xf32>
    %47 = arith.mulf %43, %46 : vector<8x16xf32>
    %48 = arith.addf %45, %47 : vector<8x16xf32>
    %cst_37 = arith.constant dense<0.000000e+00> : vector<8x8xf32>
    %49 = tpu.matmul %48, %0, %cst_37 {dimension_numbers = #tpu.dot_dimension_numbers<[1], [0], [0], [1], [0, 0, 1, 1], [], []>} : vector<8x16xf32>, vector<16x8xf32>, vector<8x8xf32> -> vector<8x8xf32>
    %c0_38 = arith.constant 0 : index
    %c3_39 = arith.constant 3 : index
    %c0_40 = arith.constant 0 : index
    %50 = vector.load %arg3[%c0_38, %c3_39, %c0_40] : memref<8x8x8xf32, #tpu.memory_space<vmem>>, vector<8x1x8xf32>
    %51 = vector.shape_cast %50 : vector<8x1x8xf32> to vector<8x8xf32>
    %52 = vector.shape_cast %49 : vector<8x8xf32> to vector<8x1x8xf32>
    tpu.vector_store %arg3[%c0_38, %c3_39, %c0_40], %52 {strides = array<i32>} : memref<8x8x8xf32, #tpu.memory_space<vmem>>, vector<8x1x8xf32>,
    %c0_41 = arith.constant 0 : index
    %c8 = arith.constant 8 : index
    %c0_42 = arith.constant 0 : index
    %53 = vector.load %arg1[%c0_41, %c8, %c0_42] : memref<8x16x16xf32, #tpu.memory_space<vmem>>, vector<8x1x16xf32>
    %54 = vector.shape_cast %53 : vector<8x1x16xf32> to vector<8x16xf32>
    %c0_43 = arith.constant 0 : index
    %c9 = arith.constant 9 : index
    %c0_44 = arith.constant 0 : index
    %55 = vector.load %arg1[%c0_43, %c9, %c0_44] : memref<8x16x16xf32, #tpu.memory_space<vmem>>, vector<8x1x16xf32>
    %56 = vector.shape_cast %55 : vector<8x1x16xf32> to vector<8x16xf32>
    %cst_45 = arith.constant 5.000000e-01 : f32
    %57 = vector.broadcast %cst_45 : f32 to vector<8x16xf32>
    %58 = arith.mulf %54, %57 : vector<8x16xf32>
    %cst_46 = arith.constant 5.000000e-01 : f32
    %59 = vector.broadcast %cst_46 : f32 to vector<8x16xf32>
    %60 = arith.mulf %56, %59 : vector<8x16xf32>
    %61 = arith.addf %58, %60 : vector<8x16xf32>
    %cst_47 = arith.constant dense<0.000000e+00> : vector<8x8xf32>
    %62 = tpu.matmul %61, %0, %cst_47 {dimension_numbers = #tpu.dot_dimension_numbers<[1], [0], [0], [1], [0, 0, 1, 1], [], []>} : vector<8x16xf32>, vector<16x8xf32>, vector<8x8xf32> -> vector<8x8xf32>
    %c0_48 = arith.constant 0 : index
    %c4_49 = arith.constant 4 : index
    %c0_50 = arith.constant 0 : index
    %63 = vector.load %arg3[%c0_48, %c4_49, %c0_50] : memref<8x8x8xf32, #tpu.memory_space<vmem>>, vector<8x1x8xf32>
    %64 = vector.shape_cast %63 : vector<8x1x8xf32> to vector<8x8xf32>
    %65 = vector.shape_cast %62 : vector<8x8xf32> to vector<8x1x8xf32>
    tpu.vector_store %arg3[%c0_48, %c4_49, %c0_50], %65 {strides = array<i32>} : memref<8x8x8xf32, #tpu.memory_space<vmem>>, vector<8x1x8xf32>,
    %c0_51 = arith.constant 0 : index
    %c10 = arith.constant 10 : index
    %c0_52 = arith.constant 0 : index
    %66 = vector.load %arg1[%c0_51, %c10, %c0_52] : memref<8x16x16xf32, #tpu.memory_space<vmem>>, vector<8x1x16xf32>
    %67 = vector.shape_cast %66 : vector<8x1x16xf32> to vector<8x16xf32>
    %c0_53 = arith.constant 0 : index
    %c11 = arith.constant 11 : index
    %c0_54 = arith.constant 0 : index
    %68 = vector.load %arg1[%c0_53, %c11, %c0_54] : memref<8x16x16xf32, #tpu.memory_space<vmem>>, vector<8x1x16xf32>
    %69 = vector.shape_cast %68 : vector<8x1x16xf32> to vector<8x16xf32>
    %cst_55 = arith.constant 5.000000e-01 : f32
    %70 = vector.broadcast %cst_55 : f32 to vector<8x16xf32>
    %71 = arith.mulf %67, %70 : vector<8x16xf32>
    %cst_56 = arith.constant 5.000000e-01 : f32
    %72 = vector.broadcast %cst_56 : f32 to vector<8x16xf32>
    %73 = arith.mulf %69, %72 : vector<8x16xf32>
    %74 = arith.addf %71, %73 : vector<8x16xf32>
    %cst_57 = arith.constant dense<0.000000e+00> : vector<8x8xf32>
    %75 = tpu.matmul %74, %0, %cst_57 {dimension_numbers = #tpu.dot_dimension_numbers<[1], [0], [0], [1], [0, 0, 1, 1], [], []>} : vector<8x16xf32>, vector<16x8xf32>, vector<8x8xf32> -> vector<8x8xf32>
    %c0_58 = arith.constant 0 : index
    %c5_59 = arith.constant 5 : index
    %c0_60 = arith.constant 0 : index
    %76 = vector.load %arg3[%c0_58, %c5_59, %c0_60] : memref<8x8x8xf32, #tpu.memory_space<vmem>>, vector<8x1x8xf32>
    %77 = vector.shape_cast %76 : vector<8x1x8xf32> to vector<8x8xf32>
    %78 = vector.shape_cast %75 : vector<8x8xf32> to vector<8x1x8xf32>
    tpu.vector_store %arg3[%c0_58, %c5_59, %c0_60], %78 {strides = array<i32>} : memref<8x8x8xf32, #tpu.memory_space<vmem>>, vector<8x1x8xf32>,
    %c0_61 = arith.constant 0 : index
    %c12 = arith.constant 12 : index
    %c0_62 = arith.constant 0 : index
    %79 = vector.load %arg1[%c0_61, %c12, %c0_62] : memref<8x16x16xf32, #tpu.memory_space<vmem>>, vector<8x1x16xf32>
    %80 = vector.shape_cast %79 : vector<8x1x16xf32> to vector<8x16xf32>
    %c0_63 = arith.constant 0 : index
    %c13 = arith.constant 13 : index
    %c0_64 = arith.constant 0 : index
    %81 = vector.load %arg1[%c0_63, %c13, %c0_64] : memref<8x16x16xf32, #tpu.memory_space<vmem>>, vector<8x1x16xf32>
    %82 = vector.shape_cast %81 : vector<8x1x16xf32> to vector<8x16xf32>
    %cst_65 = arith.constant 5.000000e-01 : f32
    %83 = vector.broadcast %cst_65 : f32 to vector<8x16xf32>
    %84 = arith.mulf %80, %83 : vector<8x16xf32>
    %cst_66 = arith.constant 5.000000e-01 : f32
    %85 = vector.broadcast %cst_66 : f32 to vector<8x16xf32>
    %86 = arith.mulf %82, %85 : vector<8x16xf32>
    %87 = arith.addf %84, %86 : vector<8x16xf32>
    %cst_67 = arith.constant dense<0.000000e+00> : vector<8x8xf32>
    %88 = tpu.matmul %87, %0, %cst_67 {dimension_numbers = #tpu.dot_dimension_numbers<[1], [0], [0], [1], [0, 0, 1, 1], [], []>} : vector<8x16xf32>, vector<16x8xf32>, vector<8x8xf32> -> vector<8x8xf32>
    %c0_68 = arith.constant 0 : index
    %c6_69 = arith.constant 6 : index
    %c0_70 = arith.constant 0 : index
    %89 = vector.load %arg3[%c0_68, %c6_69, %c0_70] : memref<8x8x8xf32, #tpu.memory_space<vmem>>, vector<8x1x8xf32>
    %90 = vector.shape_cast %89 : vector<8x1x8xf32> to vector<8x8xf32>
    %91 = vector.shape_cast %88 : vector<8x8xf32> to vector<8x1x8xf32>
    tpu.vector_store %arg3[%c0_68, %c6_69, %c0_70], %91 {strides = array<i32>} : memref<8x8x8xf32, #tpu.memory_space<vmem>>, vector<8x1x8xf32>,
    %c0_71 = arith.constant 0 : index
    %c14 = arith.constant 14 : index
    %c0_72 = arith.constant 0 : index
    %92 = vector.load %arg1[%c0_71, %c14, %c0_72] : memref<8x16x16xf32, #tpu.memory_space<vmem>>, vector<8x1x16xf32>
    %93 = vector.shape_cast %92 : vector<8x1x16xf32> to vector<8x16xf32>
    %c0_73 = arith.constant 0 : index
    %c15 = arith.constant 15 : index
    %c0_74 = arith.constant 0 : index
    %94 = vector.load %arg1[%c0_73, %c15, %c0_74] : memref<8x16x16xf32, #tpu.memory_space<vmem>>, vector<8x1x16xf32>
    %95 = vector.shape_cast %94 : vector<8x1x16xf32> to vector<8x16xf32>
    %cst_75 = arith.constant 5.000000e-01 : f32
    %96 = vector.broadcast %cst_75 : f32 to vector<8x16xf32>
    %97 = arith.mulf %93, %96 : vector<8x16xf32>
    %cst_76 = arith.constant 5.000000e-01 : f32
    %98 = vector.broadcast %cst_76 : f32 to vector<8x16xf32>
    %99 = arith.mulf %95, %98 : vector<8x16xf32>
    %100 = arith.addf %97, %99 : vector<8x16xf32>
    %cst_77 = arith.constant dense<0.000000e+00> : vector<8x8xf32>
    %101 = tpu.matmul %100, %0, %cst_77 {dimension_numbers = #tpu.dot_dimension_numbers<[1], [0], [0], [1], [0, 0, 1, 1], [], []>} : vector<8x16xf32>, vector<16x8xf32>, vector<8x8xf32> -> vector<8x8xf32>
    %c0_78 = arith.constant 0 : index
    %c7_79 = arith.constant 7 : index
    %c0_80 = arith.constant 0 : index
    %102 = vector.load %arg3[%c0_78, %c7_79, %c0_80] : memref<8x8x8xf32, #tpu.memory_space<vmem>>, vector<8x1x8xf32>
    %103 = vector.shape_cast %102 : vector<8x1x8xf32> to vector<8x8xf32>
    %104 = vector.shape_cast %101 : vector<8x8xf32> to vector<8x1x8xf32>
    tpu.vector_store %arg3[%c0_78, %c7_79, %c0_80], %104 {strides = array<i32>} : memref<8x8x8xf32, #tpu.memory_space<vmem>>, vector<8x1x8xf32>,
    return
  }
  func.func @transform_0(%arg0: i32) -> (i32, i32, i32) {
    %c0_i32 = arith.constant 0 : i32
    %c0_i32_0 = arith.constant 0 : i32
    %c0_i32_1 = arith.constant 0 : i32
    return %arg0, %c0_i32, %c0_i32_0 : i32, i32, i32
  }
  func.func @transform_1(%arg0: i32) -> (i32, i32) {
    %c0_i32 = arith.constant 0 : i32
    %c0_i32_0 = arith.constant 0 : i32
    %c0_i32_1 = arith.constant 0 : i32
    return %c0_i32, %c0_i32_0 : i32, i32
  }
  func.func @transform_2(%arg0: i32) -> (i32, i32, i32) {
    %c0_i32 = arith.constant 0 : i32
    %c0_i32_0 = arith.constant 0 : i32
    %c0_i32_1 = arith.constant 0 : i32
    return %arg0, %c0_i32, %c0_i32_0 : i32, i32, i32
  }
}

</mosaic_0001>

<llo_original>
// kernel: up_or_down_sampling_effect.1
$region0: #{up_or_down_sampling_effect.1}
  #allocation0 [shape = 'u32[]', space=smem, size = 0x4, offset = 0x4, fixed_abs, tag = 'smem constant byte address 0x4 - core index']
  #allocation1 [shape = 'u32[144,128]{1,0:T(1,128)}', space=vmem, size = 0x12000, scoped, tag = 'internal scratch']
  %s0 = inlined_call_operand.vmem [shape: f32[16,16,16], index: 0, kind: input, shape index: {}]
  %s1 = inlined_call_operand.vmem [shape: f32[16,8], index: 1, kind: input, shape index: {}]
  %s2 = inlined_call_operand.vmem [shape: f32[16,8,8], index: 2, kind: output, shape index: {}]
  %s3 = sld [smem:[#allocation0]]
  $region41: #{up_or_down_sampling_effect.1} parent=0
    _
  %s5 = ssub.s32 1, %s3
  %s6 = scalar_select 0, %s5, %s3
  loop: start=0, step=1, limit=4
  $region2: #{up_or_down_sampling_effect.1} parent=0 // loop_pre_header
    _
  $region3: #{up_or_down_sampling_effect.1} parent=0 // loop_header
    %s8 = sphi 0, %s12
    %p9 = scmp.ge.s32.totalorder %s8, 4
    %s18 = sphi 0, %s20
    %s21 = sphi 0, %s18
    %s22 = sphi 0, %s21
    %s38 = sphi 0, %s22
    %s42 = sphi 0, %s42
    %s44 = sphi 0, %s42
    %s45 = sphi 0, %s44
    %s59 = sphi 0, %s45
    %s65 = sphi 0, %s67
    %s68 = sphi 0, %s65
    %s69 = sphi 0, %s68
    %s85 = sphi 0, %s69
  $region4: #{up_or_down_sampling_effect.1} parent=0 // loop_header_branch
    %11 = sbr.rel (%p9) target = $region8
  $region5: #{up_or_down_sampling_effect.1} parent=0 // loop_body
    %s13 = ssub.s32 %s8, 1
    %s14 = ssub.s32 %s8, 2
    %s15 = sadd.s32 %s8, 1
    %s16 = ssub.s32 %s8, %s15
    %p17 = scmp.eq.s32.totalorder %s16, 0
    %s19 = sadd.s32 %s18, 1
    %s20 = scalar_select %p17, %s18, %s19
    %p23 = pneg %p17
    %p24 = scmp.eq.s32.totalorder %s8, 1
    %p25 = por %p23, %p24
    %p26 = scmp.ne.s32.totalorder %s18, %s21
    %p27 = scmp.eq.s32.totalorder %s8, 0
    %p28 = por %p26, %p27
    %p29 = scmp.ne.s32.totalorder %s18, %s21
    %p30 = scmp.eq.s32.totalorder %s13, 1
    %p31 = por %p29, %p30
    %p32 = scmp.ne.s32.totalorder %s21, %s22
    %p33 = scmp.eq.s32.totalorder %s13, 0
    %p34 = por %p32, %p33
    %p35 = scmp.ne.s32.totalorder %s21, %s22
    %p36 = scmp.eq.s32.totalorder %s14, 1
    %p37 = por %p35, %p36
    %p39 = scmp.ne.s32.totalorder %s22, %s38
    %p40 = scmp.eq.s32.totalorder %s14, 0
    %p41 = por %p39, %p40
    %s43 = sadd.s32 %s42, 1
    %p46 = scmp.eq.s32.totalorder %s8, 1
    %p47 = scmp.ne.s32.totalorder %s42, %s44
    %p48 = scmp.eq.s32.totalorder %s8, 0
    %p49 = por %p47, %p48
    %p50 = scmp.ne.s32.totalorder %s42, %s44
    %p51 = scmp.eq.s32.totalorder %s13, 1
    %p52 = por %p50, %p51
    %p53 = scmp.ne.s32.totalorder %s44, %s45
    %p54 = scmp.eq.s32.totalorder %s13, 0
    %p55 = por %p53, %p54
    %p56 = scmp.ne.s32.totalorder %s44, %s45
    %p57 = scmp.eq.s32.totalorder %s14, 1
    %p58 = por %p56, %p57
    %p60 = scmp.ne.s32.totalorder %s45, %s59
    %p61 = scmp.eq.s32.totalorder %s14, 0
    %p62 = por %p60, %p61
    %s63 = ssub.s32 %s8, %s15
    %p64 = scmp.eq.s32.totalorder %s63, 0
    %s66 = sadd.s32 %s65, 1
    %s67 = scalar_select %p64, %s65, %s66
    %p70 = pneg %p64
    %p71 = scmp.eq.s32.totalorder %s8, 1
    %p72 = por %p70, %p71
    %p73 = scmp.ne.s32.totalorder %s65, %s68
    %p74 = scmp.eq.s32.totalorder %s8, 0
    %p75 = por %p73, %p74
    %p76 = scmp.ne.s32.totalorder %s65, %s68
    %p77 = scmp.eq.s32.totalorder %s13, 1
    %p78 = por %p76, %p77
    %p79 = scmp.ne.s32.totalorder %s68, %s69
    %p80 = scmp.eq.s32.totalorder %s13, 0
    %p81 = por %p79, %p80
    %p82 = scmp.ne.s32.totalorder %s68, %s69
    %p83 = scmp.eq.s32.totalorder %s14, 1
    %p84 = por %p82, %p83
    %p86 = scmp.ne.s32.totalorder %s69, %s85
    %p87 = scmp.eq.s32.totalorder %s14, 0
    %p88 = por %p86, %p87
    %p89 = scmp.le.s32.totalorder 1, %s8
    %p90 = scmp.lt.s32.totalorder %s8, 3
    %p91 = pnand %p89, %p90
    %p92 = pneg %p91
    // Predicated region
    $region9: #{up_or_down_sampling_effect.1} parent=5 // pred_check
      _
    $region10: #{up_or_down_sampling_effect.1} parent=5 // pred_check_branch
      %94 = sbr.rel (%p91) target = $region12
    $region11: #{up_or_down_sampling_effect.1} parent=5 // pred_region
      %s95 = ssub.s32 %s8, 1
      // Predicated region
      $region13: #{up_or_down_sampling_effect.1} parent=11 // pred_check
        %p96 = pneg %p55
      $region14: #{up_or_down_sampling_effect.1} parent=11 // pred_check_branch
        %98 = sbr.rel (%p96) target = $region16
      $region15: #{up_or_down_sampling_effect.1} parent=11 // pred_region
        _
      $region16: #{up_or_down_sampling_effect.1} parent=11 // pred_fallthru
        _
    $region12: #{up_or_down_sampling_effect.1} parent=5 // pred_fallthru
      _
    %p99 = scmp.lt.s32.totalorder %s8, 2
    // Predicated region
    $region17: #{up_or_down_sampling_effect.1} parent=5 // pred_check
      %p100 = pneg %p99
    $region18: #{up_or_down_sampling_effect.1} parent=5 // pred_check_branch
      %102 = sbr.rel (%p100) target = $region20
    $region19: #{up_or_down_sampling_effect.1} parent=5 // pred_region
      // Predicated region
      $region21: #{up_or_down_sampling_effect.1} parent=19 // pred_check
        %p103 = pneg %p28
      $region22: #{up_or_down_sampling_effect.1} parent=19 // pred_check_branch
        %105 = sbr.rel (%p103) target = $region24
      $region23: #{up_or_down_sampling_effect.1} parent=19 // pred_region
        %s106 = smul.u32 8, %s8
        %p107 = scmp.lt.s32.totalorder %s106, 15
        %s108 = scalar_select %p107, %s106, 15
        %s109 = smul.addr %s108, 2
        %s110 = smul.addr %s109, 8
        %s111 = scalar_lea.vmem %s0, %s110
        %s112 = smul.u32 8, %s8
      $region24: #{up_or_down_sampling_effect.1} parent=19 // pred_fallthru
        _
    $region20: #{up_or_down_sampling_effect.1} parent=5 // pred_fallthru
      _
    %p113 = scmp.le.s32.totalorder 1, %s8
    %p114 = scmp.lt.s32.totalorder %s8, 3
    %p115 = pnand %p113, %p114
    %p116 = pneg %p115
    // Predicated region
    $region25: #{up_or_down_sampling_effect.1} parent=5 // pred_check
      _
    $region26: #{up_or_down_sampling_effect.1} parent=5 // pred_check_branch
      %118 = sbr.rel (%p115) target = $region28
    $region27: #{up_or_down_sampling_effect.1} parent=5 // pred_region
      %s119 = ssub.s32 %s8, 1
      %s120 = smul.u32 8, %s13
      %p121 = scmp.lt.s32.totalorder %s120, 15
      %s122 = scalar_select %p121, %s120, 15
      %s123 = smul.addr %s122, 2
      %s124 = smul.addr %s123, 8
      %s125 = scalar_lea.vmem %s0, %s124
      %p126 = pneg %p34
      %p127 = pneg %p31
      %p128 = pneg %p55
      %p129 = pneg %p52
      %p130 = pneg %p81
      %p131 = pneg %p78
      %s132 = smul.u32 8, %s13
      %p133 = scmp.lt.s32.totalorder %s132, 15
      %s134 = scalar_select %p133, %s132, 15
      %s135 = smul.addr %s134, 8
      %s136 = scalar_lea.vmem %s2, %s135
      %s137 = smul.u32 8, %s13
      %p138 = scmp.lt.s32.totalorder %s137, 15
      %s139 = scalar_select %p138, %s137, 15
      %s140 = smul.addr %s139, 2
      %s141 = smul.addr %s140, 8
      %s142 = scalar_lea.vmem %s0, %s141
      %s143 = smul.u32 8, %s13
      %s144 = smul.u32 8, %s13
      %p145 = scmp.lt.s32.totalorder %s144, 15
      %s146 = scalar_select %p145, %s144, 15
      %s147 = smul.addr %s146, 8
      %s148 = scalar_lea.vmem %s2, %s147
      %s149 = smul.u32 8, %s13
      %v150 = vld [vmem:[%s1] sm:$0xff]
      %v151 = vld [vmem:[%s1 + $0x8] sm:$0xff]
      %v152 = vld [vmem:[%s142] sm:$0x1]
      %v153 = vld [vmem:[%s142 + $0x10] sm:$0x1]
      %v154 = vld [vmem:[%s142 + $0x20] sm:$0x1]
      %v155 = vld [vmem:[%s142 + $0x30] sm:$0x1]
      %v156 = vld [vmem:[%s142 + $0x40] sm:$0x1]
      %v157 = vld [vmem:[%s142 + $0x50] sm:$0x1]
      %v158 = vld [vmem:[%s142 + $0x60] sm:$0x1]
      %v159 = vld [vmem:[%s142 + $0x70] sm:$0x1]
      %v160 = vld [vmem:[%s142 + $0x1] sm:$0x1]
      %v161 = vld [vmem:[%s142 + $0x11] sm:$0x1]
      %v162 = vld [vmem:[%s142 + $0x21] sm:$0x1]
      %v163 = vld [vmem:[%s142 + $0x31] sm:$0x1]
      %v164 = vld [vmem:[%s142 + $0x41] sm:$0x1]
      %v165 = vld [vmem:[%s142 + $0x51] sm:$0x1]
      %v166 = vld [vmem:[%s142 + $0x61] sm:$0x1]
      %v167 = vld [vmem:[%s142 + $0x71] sm:$0x1]
      %v168 = vmul.f32 %v152, 0.5
      %v169 = vmul.f32 %v153, 0.5
      %v170 = vmul.f32 %v154, 0.5
      %v171 = vmul.f32 %v155, 0.5
      %v172 = vmul.f32 %v156, 0.5
      %v173 = vmul.f32 %v157, 0.5
      %v174 = vmul.f32 %v158, 0.5
      %v175 = vmul.f32 %v159, 0.5
      %v176 = vmul.f32 %v160, 0.5
      %v177 = vmul.f32 %v161, 0.5
      %v178 = vmul.f32 %v162, 0.5
      %v179 = vmul.f32 %v163, 0.5
      %v180 = vmul.f32 %v164, 0.5
      %v181 = vmul.f32 %v165, 0.5
      %v182 = vmul.f32 %v166, 0.5
      %v183 = vmul.f32 %v167, 0.5
      %v184 = vadd.f32 %v168, %v176
      %v185 = vadd.f32 %v169, %v177
      %v186 = vadd.f32 %v170, %v178
      %v187 = vadd.f32 %v171, %v179
      %v188 = vadd.f32 %v172, %v180
      %v189 = vadd.f32 %v173, %v181
      %v190 = vadd.f32 %v174, %v182
      %v191 = vadd.f32 %v175, %v183
      %v200 = vrot.slane %v185, 7
      %vm201 = vcmask 1041409
      %v202 = vsel %vm201, %v200, %v184
      %v203 = vrot.slane %v186, 6
      %vm204 = vcmask 1042434
      %v205 = vsel %vm204, %v203, %v202
      %v206 = vrot.slane %v187, 5
      %vm207 = vcmask 1043459
      %v208 = vsel %vm207, %v206, %v205
      %v209 = vrot.slane %v188, 4
      %vm210 = vcmask 1044484
      %v211 = vsel %vm210, %v209, %v208
      %v212 = vrot.slane %v189, 3
      %vm213 = vcmask 1045509
      %v214 = vsel %vm213, %v212, %v211
      %v215 = vrot.slane %v190, 2
      %vm216 = vcmask 1046534
      %v217 = vsel %vm216, %v215, %v214
      %v218 = vrot.slane %v191, 1
      %vm219 = vcmask 1047559
      %v220 = vsel %vm219, %v218, %v217
      %vm221 = vcmask 130048
      %v222 = vsel %vm221, %v220, 0
      %224 = vmatprep.subr.mxu0 0.0
      %225 = vmatpush1.msra.mxu0 %v150
      %226 = vmatprep.subr.mxu0 0.0
      %227 = vmatpush1.msra.mxu0 %v151
      %228 = vmatprep.subr.mxu0 0.0
      %229 = vmatpush1.msra.mxu0 0.0
      %230 = vmatprep.subr.mxu0 0.0
      %231 = vmatpush1.msra.mxu0 0.0
      %232 = vmatprep.subr.mxu0 0.0
      %233 = vmatpush1.msra.mxu0 0.0
      %234 = vmatprep.subr.mxu0 0.0
      %235 = vmatpush1.msra.mxu0 0.0
      %236 = vmatprep.subr.mxu0 0.0
      %237 = vmatpush1.msra.mxu0 0.0
      %238 = vmatprep.subr.mxu0 0.0
      %239 = vmatpush1.msra.mxu0 0.0
      %240 = vmatprep.subr.mxu0 0.0
      %241 = vmatpush1.msra.mxu0 0.0
      %242 = vmatprep.subr.mxu0 0.0
      %243 = vmatpush1.msra.mxu0 0.0
      %244 = vmatprep.subr.mxu0 0.0
      %245 = vmatpush1.msra.mxu0 0.0
      %246 = vmatprep.subr.mxu0 0.0
      %247 = vmatpush1.msra.mxu0 0.0
      %248 = vmatprep.subr.mxu0 0.0
      %249 = vmatpush1.msra.mxu0 0.0
      %250 = vmatprep.subr.mxu0 0.0
      %251 = vmatpush1.msra.mxu0 0.0
      %252 = vmatprep.subr.mxu0 0.0
      %253 = vmatpush1.msra.mxu0 0.0
      %254 = vmatprep.subr.mxu0 0.0
      %255 = vmatpush1.msra.mxu0 0.0
      %256 = vmatprep.subr.mxu0 0.0
      %257 = vmatpush1.msra.mxu0 0.0
      %258 = vmatprep.subr.mxu0 0.0
      %259 = vmatpush1.msra.mxu0 0.0
      %260 = vmatprep.subr.mxu0 0.0
      %261 = vmatpush1.msra.mxu0 0.0
      %262 = vmatprep.subr.mxu0 0.0
      %263 = vmatpush1.msra.mxu0 0.0
      %264 = vmatprep.subr.mxu0 0.0
      %265 = vmatpush1.msra.mxu0 0.0
      %266 = vmatprep.subr.mxu0 0.0
      %267 = vmatpush1.msra.mxu0 0.0
      %268 = vmatprep.subr.mxu0 0.0
      %269 = vmatpush1.msra.mxu0 0.0
      %270 = vmatprep.subr.mxu0 0.0
      %271 = vmatpush1.msra.mxu0 0.0
      %272 = vmatprep.subr.mxu0 0.0
      %273 = vmatpush1.msra.mxu0 0.0
      %274 = vmatprep.subr.mxu0 0.0
      %275 = vmatpush1.msra.mxu0 0.0
      %276 = vmatprep.subr.mxu0 0.0
      %277 = vmatpush1.msra.mxu0 0.0
      %278 = vmatprep.subr.mxu0 0.0
      %279 = vmatpush1.msra.mxu0 0.0
      %280 = vmatprep.subr.mxu0 0.0
      %281 = vmatpush1.msra.mxu0 0.0
      %282 = vmatprep.subr.mxu0 0.0
      %283 = vmatpush1.msra.mxu0 0.0
      %284 = vmatprep.subr.mxu0 0.0
      %285 = vmatpush1.msra.mxu0 0.0
      %286 = vmatprep.subr.mxu0 0.0
      %287 = vmatpush1.msra.mxu0 0.0
      %288 = vmatprep.mubr.f32.mxu0 0.0
      %289 = vmatmul.mubr.f32.gmra.mrb[0].mxu0 %v222
      %v290 = vpop.f32.mrb[0].mxu0
      %v291 = vadd.f32 0.0, %v290
      %v292 = vpop.f32.mrb[0].mxu0
      %293 = vdwg.mxu0
      %v295 = vcombine.high %v291, %v291
      %v297 = vunpack.c.l.s4 1966171168
      %v298 = vunpack.c.0.s8 %v297
      %v299 = vlaneseq
      %v300 = vshrl.u32 %v299, 7
      %v301 = vsub.s32 %v298, %v300
      %v302 = vrot.slane %v291, %v301
      %v304 = vunpack.c.l.s4 1966171168
      %v305 = vunpack.c.0.s8 %v304
      %v306 = vlaneseq
      %v307 = vshrl.u32 %v306, 7
      %v308 = vsub.s32 %v305, %v307
      %v309 = vrot.slane %v295, %v308
      %v310 = vcombine.high %v302, %v302
      %v311 = vcombine.high %v309, %v309
      %v313 = vunpack.c.l.s4 1966171168
      %v314 = vunpack.c.0.s8 %v313
      %v315 = vlaneseq
      %v316 = vshrl.u32 %v315, 7
      %v317 = vsub.s32 %v314, %v316
      %v318 = vrot.slane %v302, %v317
      %v320 = vunpack.c.l.s4 1966171168
      %v321 = vunpack.c.0.s8 %v320
      %v322 = vlaneseq
      %v323 = vshrl.u32 %v322, 7
      %v324 = vsub.s32 %v321, %v323
      %v325 = vrot.slane %v309, %v324
      %v327 = vunpack.c.l.s4 1966171168
      %v328 = vunpack.c.0.s8 %v327
      %v329 = vlaneseq
      %v330 = vshrl.u32 %v329, 7
      %v331 = vsub.s32 %v328, %v330
      %v332 = vrot.slane %v310, %v331
      %v334 = vunpack.c.l.s4 1966171168
      %v335 = vunpack.c.0.s8 %v334
      %v336 = vlaneseq
      %v337 = vshrl.u32 %v336, 7
      %v338 = vsub.s32 %v335, %v337
      %v339 = vrot.slane %v311, %v338
      %v340 = vcombine.high %v318, %v318
      %v341 = vcombine.high %v325, %v325
      %v342 = vcombine.high %v332, %v332
      %v343 = vcombine.high %v339, %v339
      %vm352 = vcmask 57344
      %353 = vst.msk [vmem:[%s148] sm:$0x1] %vm352, %v318
      %354 = vst.msk [vmem:[%s148 + $0x8] sm:$0x1] %vm352, %v332
      %355 = vst.msk [vmem:[%s148 + $0x10] sm:$0x1] %vm352, %v340
      %356 = vst.msk [vmem:[%s148 + $0x18] sm:$0x1] %vm352, %v342
      %357 = vst.msk [vmem:[%s148 + $0x20] sm:$0x1] %vm352, %v325
      %358 = vst.msk [vmem:[%s148 + $0x28] sm:$0x1] %vm352, %v339
      %359 = vst.msk [vmem:[%s148 + $0x30] sm:$0x1] %vm352, %v341
      %360 = vst.msk [vmem:[%s148 + $0x38] sm:$0x1] %vm352, %v343
      %v361 = vld [vmem:[%s142 + $0x2] sm:$0x1]
      %v362 = vld [vmem:[%s142 + $0x12] sm:$0x1]
      %v363 = vld [vmem:[%s142 + $0x22] sm:$0x1]
      %v364 = vld [vmem:[%s142 + $0x32] sm:$0x1]
      %v365 = vld [vmem:[%s142 + $0x42] sm:$0x1]
      %v366 = vld [vmem:[%s142 + $0x52] sm:$0x1]
      %v367 = vld [vmem:[%s142 + $0x62] sm:$0x1]
      %v368 = vld [vmem:[%s142 + $0x72] sm:$0x1]
      %v369 = vld [vmem:[%s142 + $0x3] sm:$0x1]
      %v370 = vld [vmem:[%s142 + $0x13] sm:$0x1]
      %v371 = vld [vmem:[%s142 + $0x23] sm:$0x1]
      %v372 = vld [vmem:[%s142 + $0x33] sm:$0x1]
      %v373 = vld [vmem:[%s142 + $0x43] sm:$0x1]
      %v374 = vld [vmem:[%s142 + $0x53] sm:$0x1]
      %v375 = vld [vmem:[%s142 + $0x63] sm:$0x1]
      %v376 = vld [vmem:[%s142 + $0x73] sm:$0x1]
      %v377 = vmul.f32 %v361, 0.5
      %v378 = vmul.f32 %v362, 0.5
      %v379 = vmul.f32 %v363, 0.5
      %v380 = vmul.f32 %v364, 0.5
      %v381 = vmul.f32 %v365, 0.5
      %v382 = vmul.f32 %v366, 0.5
      %v383 = vmul.f32 %v367, 0.5
      %v384 = vmul.f32 %v368, 0.5
      %v385 = vmul.f32 %v369, 0.5
      %v386 = vmul.f32 %v370, 0.5
      %v387 = vmul.f32 %v371, 0.5
      %v388 = vmul.f32 %v372, 0.5
      %v389 = vmul.f32 %v373, 0.5
      %v390 = vmul.f32 %v374, 0.5
      %v391 = vmul.f32 %v375, 0.5
      %v392 = vmul.f32 %v376, 0.5
      %v393 = vadd.f32 %v377, %v385
      %v394 = vadd.f32 %v378, %v386
      %v395 = vadd.f32 %v379, %v387
      %v396 = vadd.f32 %v380, %v388
      %v397 = vadd.f32 %v381, %v389
      %v398 = vadd.f32 %v382, %v390
      %v399 = vadd.f32 %v383, %v391
      %v400 = vadd.f32 %v384, %v392
      %v409 = vrot.slane %v394, 7
      %v410 = vsel %vm201, %v409, %v393
      %v411 = vrot.slane %v395, 6
      %v412 = vsel %vm204, %v411, %v410
      %v413 = vrot.slane %v396, 5
      %v414 = vsel %vm207, %v413, %v412
      %v415 = vrot.slane %v397, 4
      %v416 = vsel %vm210, %v415, %v414
      %v417 = vrot.slane %v398, 3
      %v418 = vsel %vm213, %v417, %v416
      %v419 = vrot.slane %v399, 2
      %v420 = vsel %vm216, %v419, %v418
      %v421 = vrot.slane %v400, 1
      %v422 = vsel %vm219, %v421, %v420
      %v423 = vsel %vm221, %v422, 0
      %425 = vmatprep.subr.mxu0 0.0
      %426 = vmatpush1.msra.mxu0 %v150
      %427 = vmatprep.subr.mxu0 0.0
      %428 = vmatpush1.msra.mxu0 %v151
      %429 = vmatprep.subr.mxu0 0.0
      %430 = vmatpush1.msra.mxu0 0.0
      %431 = vmatprep.subr.mxu0 0.0
      %432 = vmatpush1.msra.mxu0 0.0
      %433 = vmatprep.subr.mxu0 0.0
      %434 = vmatpush1.msra.mxu0 0.0
      %435 = vmatprep.subr.mxu0 0.0
      %436 = vmatpush1.msra.mxu0 0.0
      %437 = vmatprep.subr.mxu0 0.0
      %438 = vmatpush1.msra.mxu0 0.0
      %439 = vmatprep.subr.mxu0 0.0
      %440 = vmatpush1.msra.mxu0 0.0
      %441 = vmatprep.subr.mxu0 0.0
      %442 = vmatpush1.msra.mxu0 0.0
      %443 = vmatprep.subr.mxu0 0.0
      %444 = vmatpush1.msra.mxu0 0.0
      %445 = vmatprep.subr.mxu0 0.0
      %446 = vmatpush1.msra.mxu0 0.0
      %447 = vmatprep.subr.mxu0 0.0
      %448 = vmatpush1.msra.mxu0 0.0
      %449 = vmatprep.subr.mxu0 0.0
      %450 = vmatpush1.msra.mxu0 0.0
      %451 = vmatprep.subr.mxu0 0.0
      %452 = vmatpush1.msra.mxu0 0.0
      %453 = vmatprep.subr.mxu0 0.0
      %454 = vmatpush1.msra.mxu0 0.0
      %455 = vmatprep.subr.mxu0 0.0
      %456 = vmatpush1.msra.mxu0 0.0
      %457 = vmatprep.subr.mxu0 0.0
      %458 = vmatpush1.msra.mxu0 0.0
      %459 = vmatprep.subr.mxu0 0.0
      %460 = vmatpush1.msra.mxu0 0.0
      %461 = vmatprep.subr.mxu0 0.0
      %462 = vmatpush1.msra.mxu0 0.0
      %463 = vmatprep.subr.mxu0 0.0
      %464 = vmatpush1.msra.mxu0 0.0
      %465 = vmatprep.subr.mxu0 0.0
      %466 = vmatpush1.msra.mxu0 0.0
      %467 = vmatprep.subr.mxu0 0.0
      %468 = vmatpush1.msra.mxu0 0.0
      %469 = vmatprep.subr.mxu0 0.0
      %470 = vmatpush1.msra.mxu0 0.0
      %471 = vmatprep.subr.mxu0 0.0
      %472 = vmatpush1.msra.mxu0 0.0
      %473 = vmatprep.subr.mxu0 0.0
      %474 = vmatpush1.msra.mxu0 0.0
      %475 = vmatprep.subr.mxu0 0.0
      %476 = vmatpush1.msra.mxu0 0.0
      %477 = vmatprep.subr.mxu0 0.0
      %478 = vmatpush1.msra.mxu0 0.0
      %479 = vmatprep.subr.mxu0 0.0
      %480 = vmatpush1.msra.mxu0 0.0
      %481 = vmatprep.subr.mxu0 0.0
      %482 = vmatpush1.msra.mxu0 0.0
      %483 = vmatprep.subr.mxu0 0.0
      %484 = vmatpush1.msra.mxu0 0.0
      %485 = vmatprep.subr.mxu0 0.0
      %486 = vmatpush1.msra.mxu0 0.0
      %487 = vmatprep.subr.mxu0 0.0
      %488 = vmatpush1.msra.mxu0 0.0
      %489 = vmatprep.mubr.f32.mxu0 0.0
      %490 = vmatmul.mubr.f32.gmra.mrb[0].mxu0 %v423
      %v491 = vpop.f32.mrb[0].mxu0
      %v492 = vadd.f32 0.0, %v491
      %v493 = vpop.f32.mrb[0].mxu0
      %494 = vdwg.mxu0
      %v496 = vcombine.high %v492, %v492
      %v498 = vunpack.c.l.s4 1966171168
      %v499 = vunpack.c.0.s8 %v498
      %v500 = vlaneseq
      %v501 = vshrl.u32 %v500, 7
      %v502 = vsub.s32 %v499, %v501
      %v503 = vrot.slane %v492, %v502
      %v505 = vunpack.c.l.s4 1966171168
      %v506 = vunpack.c.0.s8 %v505
      %v507 = vlaneseq
      %v508 = vshrl.u32 %v507, 7
      %v509 = vsub.s32 %v506, %v508
      %v510 = vrot.slane %v496, %v509
      %v511 = vcombine.high %v503, %v503
      %v512 = vcombine.high %v510, %v510
      %v514 = vunpack.c.l.s4 1966171168
      %v515 = vunpack.c.0.s8 %v514
      %v516 = vlaneseq
      %v517 = vshrl.u32 %v516, 7
      %v518 = vsub.s32 %v515, %v517
      %v519 = vrot.slane %v503, %v518
      %v521 = vunpack.c.l.s4 1966171168
      %v522 = vunpack.c.0.s8 %v521
      %v523 = vlaneseq
      %v524 = vshrl.u32 %v523, 7
      %v525 = vsub.s32 %v522, %v524
      %v526 = vrot.slane %v510, %v525
      %v528 = vunpack.c.l.s4 1966171168
      %v529 = vunpack.c.0.s8 %v528
      %v530 = vlaneseq
      %v531 = vshrl.u32 %v530, 7
      %v532 = vsub.s32 %v529, %v531
      %v533 = vrot.slane %v511, %v532
      %v535 = vunpack.c.l.s4 1966171168
      %v536 = vunpack.c.0.s8 %v535
      %v537 = vlaneseq
      %v538 = vshrl.u32 %v537, 7
      %v539 = vsub.s32 %v536, %v538
      %v540 = vrot.slane %v512, %v539
      %v541 = vcombine.high %v519, %v519
      %v542 = vcombine.high %v526, %v526
      %v543 = vcombine.high %v533, %v533
      %v544 = vcombine.high %v540, %v540
      %553 = vst.msk [vmem:[%s148 + $0x1] sm:$0x1] %vm352, %v519
      %554 = vst.msk [vmem:[%s148 + $0x9] sm:$0x1] %vm352, %v533
      %555 = vst.msk [vmem:[%s148 + $0x11] sm:$0x1] %vm352, %v541
      %556 = vst.msk [vmem:[%s148 + $0x19] sm:$0x1] %vm352, %v543
      %557 = vst.msk [vmem:[%s148 + $0x21] sm:$0x1] %vm352, %v526
      %558 = vst.msk [vmem:[%s148 + $0x29] sm:$0x1] %vm352, %v540
      %559 = vst.msk [vmem:[%s148 + $0x31] sm:$0x1] %vm352, %v542
      %560 = vst.msk [vmem:[%s148 + $0x39] sm:$0x1] %vm352, %v544
      %v561 = vld [vmem:[%s142 + $0x4] sm:$0x1]
      %v562 = vld [vmem:[%s142 + $0x14] sm:$0x1]
      %v563 = vld [vmem:[%s142 + $0x24] sm:$0x1]
      %v564 = vld [vmem:[%s142 + $0x34] sm:$0x1]
      %v565 = vld [vmem:[%s142 + $0x44] sm:$0x1]
      %v566 = vld [vmem:[%s142 + $0x54] sm:$0x1]
      %v567 = vld [vmem:[%s142 + $0x64] sm:$0x1]
      %v568 = vld [vmem:[%s142 + $0x74] sm:$0x1]
      %v569 = vld [vmem:[%s142 + $0x5] sm:$0x1]
      %v570 = vld [vmem:[%s142 + $0x15] sm:$0x1]
      %v571 = vld [vmem:[%s142 + $0x25] sm:$0x1]
      %v572 = vld [vmem:[%s142 + $0x35] sm:$0x1]
      %v573 = vld [vmem:[%s142 + $0x45] sm:$0x1]
      %v574 = vld [vmem:[%s142 + $0x55] sm:$0x1]
      %v575 = vld [vmem:[%s142 + $0x65] sm:$0x1]
      %v576 = vld [vmem:[%s142 + $0x75] sm:$0x1]
      %v577 = vmul.f32 %v561, 0.5
      %v578 = vmul.f32 %v562, 0.5
      %v579 = vmul.f32 %v563, 0.5
      %v580 = vmul.f32 %v564, 0.5
      %v581 = vmul.f32 %v565, 0.5
      %v582 = vmul.f32 %v566, 0.5
      %v583 = vmul.f32 %v567, 0.5
      %v584 = vmul.f32 %v568, 0.5
      %v585 = vmul.f32 %v569, 0.5
      %v586 = vmul.f32 %v570, 0.5
      %v587 = vmul.f32 %v571, 0.5
      %v588 = vmul.f32 %v572, 0.5
      %v589 = vmul.f32 %v573, 0.5
      %v590 = vmul.f32 %v574, 0.5
      %v591 = vmul.f32 %v575, 0.5
      %v592 = vmul.f32 %v576, 0.5
      %v593 = vadd.f32 %v577, %v585
      %v594 = vadd.f32 %v578, %v586
      %v595 = vadd.f32 %v579, %v587
      %v596 = vadd.f32 %v580, %v588
      %v597 = vadd.f32 %v581, %v589
      %v598 = vadd.f32 %v582, %v590
      %v599 = vadd.f32 %v583, %v591
      %v600 = vadd.f32 %v584, %v592
      %v609 = vrot.slane %v594, 7
      %v610 = vsel %vm201, %v609, %v593
      %v611 = vrot.slane %v595, 6
      %v612 = vsel %vm204, %v611, %v610
      %v613 = vrot.slane %v596, 5
      %v614 = vsel %vm207, %v613, %v612
      %v615 = vrot.slane %v597, 4
      %v616 = vsel %vm210, %v615, %v614
      %v617 = vrot.slane %v598, 3
      %v618 = vsel %vm213, %v617, %v616
      %v619 = vrot.slane %v599, 2
      %v620 = vsel %vm216, %v619, %v618
      %v621 = vrot.slane %v600, 1
      %v622 = vsel %vm219, %v621, %v620
      %v623 = vsel %vm221, %v622, 0
      %625 = vmatprep.subr.mxu0 0.0
      %626 = vmatpush1.msra.mxu0 %v150
      %627 = vmatprep.subr.mxu0 0.0
      %628 = vmatpush1.msra.mxu0 %v151
      %629 = vmatprep.subr.mxu0 0.0
      %630 = vmatpush1.msra.mxu0 0.0
      %631 = vmatprep.subr.mxu0 0.0
      %632 = vmatpush1.msra.mxu0 0.0
      %633 = vmatprep.subr.mxu0 0.0
      %634 = vmatpush1.msra.mxu0 0.0
      %635 = vmatprep.subr.mxu0 0.0
      %636 = vmatpush1.msra.mxu0 0.0
      %637 = vmatprep.subr.mxu0 0.0
      %638 = vmatpush1.msra.mxu0 0.0
      %639 = vmatprep.subr.mxu0 0.0
      %640 = vmatpush1.msra.mxu0 0.0
      %641 = vmatprep.subr.mxu0 0.0
      %642 = vmatpush1.msra.mxu0 0.0
      %643 = vmatprep.subr.mxu0 0.0
      %644 = vmatpush1.msra.mxu0 0.0
      %645 = vmatprep.subr.mxu0 0.0
      %646 = vmatpush1.msra.mxu0 0.0
      %647 = vmatprep.subr.mxu0 0.0
      %648 = vmatpush1.msra.mxu0 0.0
      %649 = vmatprep.subr.mxu0 0.0
      %650 = vmatpush1.msra.mxu0 0.0
      %651 = vmatprep.subr.mxu0 0.0
      %652 = vmatpush1.msra.mxu0 0.0
      %653 = vmatprep.subr.mxu0 0.0
      %654 = vmatpush1.msra.mxu0 0.0
      %655 = vmatprep.subr.mxu0 0.0
      %656 = vmatpush1.msra.mxu0 0.0
      %657 = vmatprep.subr.mxu0 0.0
      %658 = vmatpush1.msra.mxu0 0.0
      %659 = vmatprep.subr.mxu0 0.0
      %660 = vmatpush1.msra.mxu0 0.0
      %661 = vmatprep.subr.mxu0 0.0
      %662 = vmatpush1.msra.mxu0 0.0
      %663 = vmatprep.subr.mxu0 0.0
      %664 = vmatpush1.msra.mxu0 0.0
      %665 = vmatprep.subr.mxu0 0.0
      %666 = vmatpush1.msra.mxu0 0.0
      %667 = vmatprep.subr.mxu0 0.0
      %668 = vmatpush1.msra.mxu0 0.0
      %669 = vmatprep.subr.mxu0 0.0
      %670 = vmatpush1.msra.mxu0 0.0
      %671 = vmatprep.subr.mxu0 0.0
      %672 = vmatpush1.msra.mxu0 0.0
      %673 = vmatprep.subr.mxu0 0.0
      %674 = vmatpush1.msra.mxu0 0.0
      %675 = vmatprep.subr.mxu0 0.0
      %676 = vmatpush1.msra.mxu0 0.0
      %677 = vmatprep.subr.mxu0 0.0
      %678 = vmatpush1.msra.mxu0 0.0
      %679 = vmatprep.subr.mxu0 0.0
      %680 = vmatpush1.msra.mxu0 0.0
      %681 = vmatprep.subr.mxu0 0.0
      %682 = vmatpush1.msra.mxu0 0.0
      %683 = vmatprep.subr.mxu0 0.0
      %684 = vmatpush1.msra.mxu0 0.0
      %685 = vmatprep.subr.mxu0 0.0
      %686 = vmatpush1.msra.mxu0 0.0
      %687 = vmatprep.subr.mxu0 0.0
      %688 = vmatpush1.msra.mxu0 0.0
      %689 = vmatprep.mubr.f32.mxu0 0.0
      %690 = vmatmul.mubr.f32.gmra.mrb[0].mxu0 %v623
      %v691 = vpop.f32.mrb[0].mxu0
      %v692 = vadd.f32 0.0, %v691
      %v693 = vpop.f32.mrb[0].mxu0
      %694 = vdwg.mxu0
      %v696 = vcombine.high %v692, %v692
      %v698 = vunpack.c.l.s4 1966171168
      %v699 = vunpack.c.0.s8 %v698
      %v700 = vlaneseq
      %v701 = vshrl.u32 %v700, 7
      %v702 = vsub.s32 %v699, %v701
      %v703 = vrot.slane %v692, %v702
      %v705 = vunpack.c.l.s4 1966171168
      %v706 = vunpack.c.0.s8 %v705
      %v707 = vlaneseq
      %v708 = vshrl.u32 %v707, 7
      %v709 = vsub.s32 %v706, %v708
      %v710 = vrot.slane %v696, %v709
      %v711 = vcombine.high %v703, %v703
      %v712 = vcombine.high %v710, %v710
      %v714 = vunpack.c.l.s4 1966171168
      %v715 = vunpack.c.0.s8 %v714
      %v716 = vlaneseq
      %v717 = vshrl.u32 %v716, 7
      %v718 = vsub.s32 %v715, %v717
      %v719 = vrot.slane %v703, %v718
      %v721 = vunpack.c.l.s4 1966171168
      %v722 = vunpack.c.0.s8 %v721
      %v723 = vlaneseq
      %v724 = vshrl.u32 %v723, 7
      %v725 = vsub.s32 %v722, %v724
      %v726 = vrot.slane %v710, %v725
      %v728 = vunpack.c.l.s4 1966171168
      %v729 = vunpack.c.0.s8 %v728
      %v730 = vlaneseq
      %v731 = vshrl.u32 %v730, 7
      %v732 = vsub.s32 %v729, %v731
      %v733 = vrot.slane %v711, %v732
      %v735 = vunpack.c.l.s4 1966171168
      %v736 = vunpack.c.0.s8 %v735
      %v737 = vlaneseq
      %v738 = vshrl.u32 %v737, 7
      %v739 = vsub.s32 %v736, %v738
      %v740 = vrot.slane %v712, %v739
      %v741 = vcombine.high %v719, %v719
      %v742 = vcombine.high %v726, %v726
      %v743 = vcombine.high %v733, %v733
      %v744 = vcombine.high %v740, %v740
      %753 = vst.msk [vmem:[%s148 + $0x2] sm:$0x1] %vm352, %v719
      %754 = vst.msk [vmem:[%s148 + $0xa] sm:$0x1] %vm352, %v733
      %755 = vst.msk [vmem:[%s148 + $0x12] sm:$0x1] %vm352, %v741
      %756 = vst.msk [vmem:[%s148 + $0x1a] sm:$0x1] %vm352, %v743
      %757 = vst.msk [vmem:[%s148 + $0x22] sm:$0x1] %vm352, %v726
      %758 = vst.msk [vmem:[%s148 + $0x2a] sm:$0x1] %vm352, %v740
      %759 = vst.msk [vmem:[%s148 + $0x32] sm:$0x1] %vm352, %v742
      %760 = vst.msk [vmem:[%s148 + $0x3a] sm:$0x1] %vm352, %v744
      %v761 = vld [vmem:[%s142 + $0x6] sm:$0x1]
      %v762 = vld [vmem:[%s142 + $0x16] sm:$0x1]
      %v763 = vld [vmem:[%s142 + $0x26] sm:$0x1]
      %v764 = vld [vmem:[%s142 + $0x36] sm:$0x1]
      %v765 = vld [vmem:[%s142 + $0x46] sm:$0x1]
      %v766 = vld [vmem:[%s142 + $0x56] sm:$0x1]
      %v767 = vld [vmem:[%s142 + $0x66] sm:$0x1]
      %v768 = vld [vmem:[%s142 + $0x76] sm:$0x1]
      %v769 = vld [vmem:[%s142 + $0x7] sm:$0x1]
      %v770 = vld [vmem:[%s142 + $0x17] sm:$0x1]
      %v771 = vld [vmem:[%s142 + $0x27] sm:$0x1]
      %v772 = vld [vmem:[%s142 + $0x37] sm:$0x1]
      %v773 = vld [vmem:[%s142 + $0x47] sm:$0x1]
      %v774 = vld [vmem:[%s142 + $0x57] sm:$0x1]
      %v775 = vld [vmem:[%s142 + $0x67] sm:$0x1]
      %v776 = vld [vmem:[%s142 + $0x77] sm:$0x1]
      %v777 = vmul.f32 %v761, 0.5
      %v778 = vmul.f32 %v762, 0.5
      %v779 = vmul.f32 %v763, 0.5
      %v780 = vmul.f32 %v764, 0.5
      %v781 = vmul.f32 %v765, 0.5
      %v782 = vmul.f32 %v766, 0.5
      %v783 = vmul.f32 %v767, 0.5
      %v784 = vmul.f32 %v768, 0.5
      %v785 = vmul.f32 %v769, 0.5
      %v786 = vmul.f32 %v770, 0.5
      %v787 = vmul.f32 %v771, 0.5
      %v788 = vmul.f32 %v772, 0.5
      %v789 = vmul.f32 %v773, 0.5
      %v790 = vmul.f32 %v774, 0.5
      %v791 = vmul.f32 %v775, 0.5
      %v792 = vmul.f32 %v776, 0.5
      %v793 = vadd.f32 %v777, %v785
      %v794 = vadd.f32 %v778, %v786
      %v795 = vadd.f32 %v779, %v787
      %v796 = vadd.f32 %v780, %v788
      %v797 = vadd.f32 %v781, %v789
      %v798 = vadd.f32 %v782, %v790
      %v799 = vadd.f32 %v783, %v791
      %v800 = vadd.f32 %v784, %v792
      %v809 = vrot.slane %v794, 7
      %v810 = vsel %vm201, %v809, %v793
      %v811 = vrot.slane %v795, 6
      %v812 = vsel %vm204, %v811, %v810
      %v813 = vrot.slane %v796, 5
      %v814 = vsel %vm207, %v813, %v812
      %v815 = vrot.slane %v797, 4
      %v816 = vsel %vm210, %v815, %v814
      %v817 = vrot.slane %v798, 3
      %v818 = vsel %vm213, %v817, %v816
      %v819 = vrot.slane %v799, 2
      %v820 = vsel %vm216, %v819, %v818
      %v821 = vrot.slane %v800, 1
      %v822 = vsel %vm219, %v821, %v820
      %v823 = vsel %vm221, %v822, 0
      %825 = vmatprep.subr.mxu0 0.0
      %826 = vmatpush1.msra.mxu0 %v150
      %827 = vmatprep.subr.mxu0 0.0
      %828 = vmatpush1.msra.mxu0 %v151
      %829 = vmatprep.subr.mxu0 0.0
      %830 = vmatpush1.msra.mxu0 0.0
      %831 = vmatprep.subr.mxu0 0.0
      %832 = vmatpush1.msra.mxu0 0.0
      %833 = vmatprep.subr.mxu0 0.0
      %834 = vmatpush1.msra.mxu0 0.0
      %835 = vmatprep.subr.mxu0 0.0
      %836 = vmatpush1.msra.mxu0 0.0
      %837 = vmatprep.subr.mxu0 0.0
      %838 = vmatpush1.msra.mxu0 0.0
      %839 = vmatprep.subr.mxu0 0.0
      %840 = vmatpush1.msra.mxu0 0.0
      %841 = vmatprep.subr.mxu0 0.0
      %842 = vmatpush1.msra.mxu0 0.0
      %843 = vmatprep.subr.mxu0 0.0
      %844 = vmatpush1.msra.mxu0 0.0
      %845 = vmatprep.subr.mxu0 0.0
      %846 = vmatpush1.msra.mxu0 0.0
      %847 = vmatprep.subr.mxu0 0.0
      %848 = vmatpush1.msra.mxu0 0.0
      %849 = vmatprep.subr.mxu0 0.0
      %850 = vmatpush1.msra.mxu0 0.0
      %851 = vmatprep.subr.mxu0 0.0
      %852 = vmatpush1.msra.mxu0 0.0
      %853 = vmatprep.subr.mxu0 0.0
      %854 = vmatpush1.msra.mxu0 0.0
      %855 = vmatprep.subr.mxu0 0.0
      %856 = vmatpush1.msra.mxu0 0.0
      %857 = vmatprep.subr.mxu0 0.0
      %858 = vmatpush1.msra.mxu0 0.0
      %859 = vmatprep.subr.mxu0 0.0
      %860 = vmatpush1.msra.mxu0 0.0
      %861 = vmatprep.subr.mxu0 0.0
      %862 = vmatpush1.msra.mxu0 0.0
      %863 = vmatprep.subr.mxu0 0.0
      %864 = vmatpush1.msra.mxu0 0.0
      %865 = vmatprep.subr.mxu0 0.0
      %866 = vmatpush1.msra.mxu0 0.0
      %867 = vmatprep.subr.mxu0 0.0
      %868 = vmatpush1.msra.mxu0 0.0
      %869 = vmatprep.subr.mxu0 0.0
      %870 = vmatpush1.msra.mxu0 0.0
      %871 = vmatprep.subr.mxu0 0.0
      %872 = vmatpush1.msra.mxu0 0.0
      %873 = vmatprep.subr.mxu0 0.0
      %874 = vmatpush1.msra.mxu0 0.0
      %875 = vmatprep.subr.mxu0 0.0
      %876 = vmatpush1.msra.mxu0 0.0
      %877 = vmatprep.subr.mxu0 0.0
      %878 = vmatpush1.msra.mxu0 0.0
      %879 = vmatprep.subr.mxu0 0.0
      %880 = vmatpush1.msra.mxu0 0.0
      %881 = vmatprep.subr.mxu0 0.0
      %882 = vmatpush1.msra.mxu0 0.0
      %883 = vmatprep.subr.mxu0 0.0
      %884 = vmatpush1.msra.mxu0 0.0
      %885 = vmatprep.subr.mxu0 0.0
      %886 = vmatpush1.msra.mxu0 0.0
      %887 = vmatprep.subr.mxu0 0.0
      %888 = vmatpush1.msra.mxu0 0.0
      %889 = vmatprep.mubr.f32.mxu0 0.0
      %890 = vmatmul.mubr.f32.gmra.mrb[0].mxu0 %v823
      %v891 = vpop.f32.mrb[0].mxu0
      %v892 = vadd.f32 0.0, %v891
      %v893 = vpop.f32.mrb[0].mxu0
      %894 = vdwg.mxu0
      %v896 = vcombine.high %v892, %v892
      %v898 = vunpack.c.l.s4 1966171168
      %v899 = vunpack.c.0.s8 %v898
      %v900 = vlaneseq
      %v901 = vshrl.u32 %v900, 7
      %v902 = vsub.s32 %v899, %v901
      %v903 = vrot.slane %v892, %v902
      %v905 = vunpack.c.l.s4 1966171168
      %v906 = vunpack.c.0.s8 %v905
      %v907 = vlaneseq
      %v908 = vshrl.u32 %v907, 7
      %v909 = vsub.s32 %v906, %v908
      %v910 = vrot.slane %v896, %v909
      %v911 = vcombine.high %v903, %v903
      %v912 = vcombine.high %v910, %v910
      %v914 = vunpack.c.l.s4 1966171168
      %v915 = vunpack.c.0.s8 %v914
      %v916 = vlaneseq
      %v917 = vshrl.u32 %v916, 7
      %v918 = vsub.s32 %v915, %v917
      %v919 = vrot.slane %v903, %v918
      %v921 = vunpack.c.l.s4 1966171168
      %v922 = vunpack.c.0.s8 %v921
      %v923 = vlaneseq
      %v924 = vshrl.u32 %v923, 7
      %v925 = vsub.s32 %v922, %v924
      %v926 = vrot.slane %v910, %v925
      %v928 = vunpack.c.l.s4 1966171168
      %v929 = vunpack.c.0.s8 %v928
      %v930 = vlaneseq
      %v931 = vshrl.u32 %v930, 7
      %v932 = vsub.s32 %v929, %v931
      %v933 = vrot.slane %v911, %v932
      %v935 = vunpack.c.l.s4 1966171168
      %v936 = vunpack.c.0.s8 %v935
      %v937 = vlaneseq
      %v938 = vshrl.u32 %v937, 7
      %v939 = vsub.s32 %v936, %v938
      %v940 = vrot.slane %v912, %v939
      %v941 = vcombine.high %v919, %v919
      %v942 = vcombine.high %v926, %v926
      %v943 = vcombine.high %v933, %v933
      %v944 = vcombine.high %v940, %v940
      %953 = vst.msk [vmem:[%s148 + $0x3] sm:$0x1] %vm352, %v919
      %954 = vst.msk [vmem:[%s148 + $0xb] sm:$0x1] %vm352, %v933
      %955 = vst.msk [vmem:[%s148 + $0x13] sm:$0x1] %vm352, %v941
      %956 = vst.msk [vmem:[%s148 + $0x1b] sm:$0x1] %vm352, %v943
      %957 = vst.msk [vmem:[%s148 + $0x23] sm:$0x1] %vm352, %v926
      %958 = vst.msk [vmem:[%s148 + $0x2b] sm:$0x1] %vm352, %v940
      %959 = vst.msk [vmem:[%s148 + $0x33] sm:$0x1] %vm352, %v942
      %960 = vst.msk [vmem:[%s148 + $0x3b] sm:$0x1] %vm352, %v944
      %v961 = vld [vmem:[%s142 + $0x8] sm:$0x1]
      %v962 = vld [vmem:[%s142 + $0x18] sm:$0x1]
      %v963 = vld [vmem:[%s142 + $0x28] sm:$0x1]
      %v964 = vld [vmem:[%s142 + $0x38] sm:$0x1]
      %v965 = vld [vmem:[%s142 + $0x48] sm:$0x1]
      %v966 = vld [vmem:[%s142 + $0x58] sm:$0x1]
      %v967 = vld [vmem:[%s142 + $0x68] sm:$0x1]
      %v968 = vld [vmem:[%s142 + $0x78] sm:$0x1]
      %v969 = vld [vmem:[%s142 + $0x9] sm:$0x1]
      %v970 = vld [vmem:[%s142 + $0x19] sm:$0x1]
      %v971 = vld [vmem:[%s142 + $0x29] sm:$0x1]
      %v972 = vld [vmem:[%s142 + $0x39] sm:$0x1]
      %v973 = vld [vmem:[%s142 + $0x49] sm:$0x1]
      %v974 = vld [vmem:[%s142 + $0x59] sm:$0x1]
      %v975 = vld [vmem:[%s142 + $0x69] sm:$0x1]
      %v976 = vld [vmem:[%s142 + $0x79] sm:$0x1]
      %v977 = vmul.f32 %v961, 0.5
      %v978 = vmul.f32 %v962, 0.5
      %v979 = vmul.f32 %v963, 0.5
      %v980 = vmul.f32 %v964, 0.5
      %v981 = vmul.f32 %v965, 0.5
      %v982 = vmul.f32 %v966, 0.5
      %v983 = vmul.f32 %v967, 0.5
      %v984 = vmul.f32 %v968, 0.5
      %v985 = vmul.f32 %v969, 0.5
      %v986 = vmul.f32 %v970, 0.5
      %v987 = vmul.f32 %v971, 0.5
      %v988 = vmul.f32 %v972, 0.5
      %v989 = vmul.f32 %v973, 0.5
      %v990 = vmul.f32 %v974, 0.5
      %v991 = vmul.f32 %v975, 0.5
      %v992 = vmul.f32 %v976, 0.5
      %v993 = vadd.f32 %v977, %v985
      %v994 = vadd.f32 %v978, %v986
      %v995 = vadd.f32 %v979, %v987
      %v996 = vadd.f32 %v980, %v988
      %v997 = vadd.f32 %v981, %v989
      %v998 = vadd.f32 %v982, %v990
      %v999 = vadd.f32 %v983, %v991
      %v1000 = vadd.f32 %v984, %v992
      %v1009 = vrot.slane %v994, 7
      %v1010 = vsel %vm201, %v1009, %v993
      %v1011 = vrot.slane %v995, 6
      %v1012 = vsel %vm204, %v1011, %v1010
      %v1013 = vrot.slane %v996, 5
      %v1014 = vsel %vm207, %v1013, %v1012
      %v1015 = vrot.slane %v997, 4
      %v1016 = vsel %vm210, %v1015, %v1014
      %v1017 = vrot.slane %v998, 3
      %v1018 = vsel %vm213, %v1017, %v1016
      %v1019 = vrot.slane %v999, 2
      %v1020 = vsel %vm216, %v1019, %v1018
      %v1021 = vrot.slane %v1000, 1
      %v1022 = vsel %vm219, %v1021, %v1020
      %v1023 = vsel %vm221, %v1022, 0
      %1025 = vmatprep.subr.mxu0 0.0
      %1026 = vmatpush1.msra.mxu0 %v150
      %1027 = vmatprep.subr.mxu0 0.0
      %1028 = vmatpush1.msra.mxu0 %v151
      %1029 = vmatprep.subr.mxu0 0.0
      %1030 = vmatpush1.msra.mxu0 0.0
      %1031 = vmatprep.subr.mxu0 0.0
      %1032 = vmatpush1.msra.mxu0 0.0
      %1033 = vmatprep.subr.mxu0 0.0
      %1034 = vmatpush1.msra.mxu0 0.0
      %1035 = vmatprep.subr.mxu0 0.0
      %1036 = vmatpush1.msra.mxu0 0.0
      %1037 = vmatprep.subr.mxu0 0.0
      %1038 = vmatpush1.msra.mxu0 0.0
      %1039 = vmatprep.subr.mxu0 0.0
      %1040 = vmatpush1.msra.mxu0 0.0
      %1041 = vmatprep.subr.mxu0 0.0
      %1042 = vmatpush1.msra.mxu0 0.0
      %1043 = vmatprep.subr.mxu0 0.0
      %1044 = vmatpush1.msra.mxu0 0.0
      %1045 = vmatprep.subr.mxu0 0.0
      %1046 = vmatpush1.msra.mxu0 0.0
      %1047 = vmatprep.subr.mxu0 0.0
      %1048 = vmatpush1.msra.mxu0 0.0
      %1049 = vmatprep.subr.mxu0 0.0
      %1050 = vmatpush1.msra.mxu0 0.0
      %1051 = vmatprep.subr.mxu0 0.0
      %1052 = vmatpush1.msra.mxu0 0.0
      %1053 = vmatprep.subr.mxu0 0.0
      %1054 = vmatpush1.msra.mxu0 0.0
      %1055 = vmatprep.subr.mxu0 0.0
      %1056 = vmatpush1.msra.mxu0 0.0
      %1057 = vmatprep.subr.mxu0 0.0
      %1058 = vmatpush1.msra.mxu0 0.0
      %1059 = vmatprep.subr.mxu0 0.0
      %1060 = vmatpush1.msra.mxu0 0.0
      %1061 = vmatprep.subr.mxu0 0.0
      %1062 = vmatpush1.msra.mxu0 0.0
      %1063 = vmatprep.subr.mxu0 0.0
      %1064 = vmatpush1.msra.mxu0 0.0
      %1065 = vmatprep.subr.mxu0 0.0
      %1066 = vmatpush1.msra.mxu0 0.0
      %1067 = vmatprep.subr.mxu0 0.0
      %1068 = vmatpush1.msra.mxu0 0.0
      %1069 = vmatprep.subr.mxu0 0.0
      %1070 = vmatpush1.msra.mxu0 0.0
      %1071 = vmatprep.subr.mxu0 0.0
      %1072 = vmatpush1.msra.mxu0 0.0
      %1073 = vmatprep.subr.mxu0 0.0
      %1074 = vmatpush1.msra.mxu0 0.0
      %1075 = vmatprep.subr.mxu0 0.0
      %1076 = vmatpush1.msra.mxu0 0.0
      %1077 = vmatprep.subr.mxu0 0.0
      %1078 = vmatpush1.msra.mxu0 0.0
      %1079 = vmatprep.subr.mxu0 0.0
      %1080 = vmatpush1.msra.mxu0 0.0
      %1081 = vmatprep.subr.mxu0 0.0
      %1082 = vmatpush1.msra.mxu0 0.0
      %1083 = vmatprep.subr.mxu0 0.0
      %1084 = vmatpush1.msra.mxu0 0.0
      %1085 = vmatprep.subr.mxu0 0.0
      %1086 = vmatpush1.msra.mxu0 0.0
      %1087 = vmatprep.subr.mxu0 0.0
      %1088 = vmatpush1.msra.mxu0 0.0
      %1089 = vmatprep.mubr.f32.mxu0 0.0
      %1090 = vmatmul.mubr.f32.gmra.mrb[0].mxu0 %v1023
      %v1091 = vpop.f32.mrb[0].mxu0
      %v1092 = vadd.f32 0.0, %v1091
      %v1093 = vpop.f32.mrb[0].mxu0
      %1094 = vdwg.mxu0
      %v1096 = vcombine.high %v1092, %v1092
      %v1098 = vunpack.c.l.s4 1966171168
      %v1099 = vunpack.c.0.s8 %v1098
      %v1100 = vlaneseq
      %v1101 = vshrl.u32 %v1100, 7
      %v1102 = vsub.s32 %v1099, %v1101
      %v1103 = vrot.slane %v1092, %v1102
      %v1105 = vunpack.c.l.s4 1966171168
      %v1106 = vunpack.c.0.s8 %v1105
      %v1107 = vlaneseq
      %v1108 = vshrl.u32 %v1107, 7
      %v1109 = vsub.s32 %v1106, %v1108
      %v1110 = vrot.slane %v1096, %v1109
      %v1111 = vcombine.high %v1103, %v1103
      %v1112 = vcombine.high %v1110, %v1110
      %v1114 = vunpack.c.l.s4 1966171168
      %v1115 = vunpack.c.0.s8 %v1114
      %v1116 = vlaneseq
      %v1117 = vshrl.u32 %v1116, 7
      %v1118 = vsub.s32 %v1115, %v1117
      %v1119 = vrot.slane %v1103, %v1118
      %v1121 = vunpack.c.l.s4 1966171168
      %v1122 = vunpack.c.0.s8 %v1121
      %v1123 = vlaneseq
      %v1124 = vshrl.u32 %v1123, 7
      %v1125 = vsub.s32 %v1122, %v1124
      %v1126 = vrot.slane %v1110, %v1125
      %v1128 = vunpack.c.l.s4 1966171168
      %v1129 = vunpack.c.0.s8 %v1128
      %v1130 = vlaneseq
      %v1131 = vshrl.u32 %v1130, 7
      %v1132 = vsub.s32 %v1129, %v1131
      %v1133 = vrot.slane %v1111, %v1132
      %v1135 = vunpack.c.l.s4 1966171168
      %v1136 = vunpack.c.0.s8 %v1135
      %v1137 = vlaneseq
      %v1138 = vshrl.u32 %v1137, 7
      %v1139 = vsub.s32 %v1136, %v1138
      %v1140 = vrot.slane %v1112, %v1139
      %v1141 = vcombine.high %v1119, %v1119
      %v1142 = vcombine.high %v1126, %v1126
      %v1143 = vcombine.high %v1133, %v1133
      %v1144 = vcombine.high %v1140, %v1140
      %1153 = vst.msk [vmem:[%s148 + $0x4] sm:$0x1] %vm352, %v1119
      %1154 = vst.msk [vmem:[%s148 + $0xc] sm:$0x1] %vm352, %v1133
      %1155 = vst.msk [vmem:[%s148 + $0x14] sm:$0x1] %vm352, %v1141
      %1156 = vst.msk [vmem:[%s148 + $0x1c] sm:$0x1] %vm352, %v1143
      %1157 = vst.msk [vmem:[%s148 + $0x24] sm:$0x1] %vm352, %v1126
      %1158 = vst.msk [vmem:[%s148 + $0x2c] sm:$0x1] %vm352, %v1140
      %1159 = vst.msk [vmem:[%s148 + $0x34] sm:$0x1] %vm352, %v1142
      %1160 = vst.msk [vmem:[%s148 + $0x3c] sm:$0x1] %vm352, %v1144
      %v1161 = vld [vmem:[%s142 + $0xa] sm:$0x1]
      %v1162 = vld [vmem:[%s142 + $0x1a] sm:$0x1]
      %v1163 = vld [vmem:[%s142 + $0x2a] sm:$0x1]
      %v1164 = vld [vmem:[%s142 + $0x3a] sm:$0x1]
      %v1165 = vld [vmem:[%s142 + $0x4a] sm:$0x1]
      %v1166 = vld [vmem:[%s142 + $0x5a] sm:$0x1]
      %v1167 = vld [vmem:[%s142 + $0x6a] sm:$0x1]
      %v1168 = vld [vmem:[%s142 + $0x7a] sm:$0x1]
      %v1169 = vld [vmem:[%s142 + $0xb] sm:$0x1]
      %v1170 = vld [vmem:[%s142 + $0x1b] sm:$0x1]
      %v1171 = vld [vmem:[%s142 + $0x2b] sm:$0x1]
      %v1172 = vld [vmem:[%s142 + $0x3b] sm:$0x1]
      %v1173 = vld [vmem:[%s142 + $0x4b] sm:$0x1]
      %v1174 = vld [vmem:[%s142 + $0x5b] sm:$0x1]
      %v1175 = vld [vmem:[%s142 + $0x6b] sm:$0x1]
      %v1176 = vld [vmem:[%s142 + $0x7b] sm:$0x1]
      %v1177 = vmul.f32 %v1161, 0.5
      %v1178 = vmul.f32 %v1162, 0.5
      %v1179 = vmul.f32 %v1163, 0.5
      %v1180 = vmul.f32 %v1164, 0.5
      %v1181 = vmul.f32 %v1165, 0.5
      %v1182 = vmul.f32 %v1166, 0.5
      %v1183 = vmul.f32 %v1167, 0.5
      %v1184 = vmul.f32 %v1168, 0.5
      %v1185 = vmul.f32 %v1169, 0.5
      %v1186 = vmul.f32 %v1170, 0.5
      %v1187 = vmul.f32 %v1171, 0.5
      %v1188 = vmul.f32 %v1172, 0.5
      %v1189 = vmul.f32 %v1173, 0.5
      %v1190 = vmul.f32 %v1174, 0.5
      %v1191 = vmul.f32 %v1175, 0.5
      %v1192 = vmul.f32 %v1176, 0.5
      %v1193 = vadd.f32 %v1177, %v1185
      %v1194 = vadd.f32 %v1178, %v1186
      %v1195 = vadd.f32 %v1179, %v1187
      %v1196 = vadd.f32 %v1180, %v1188
      %v1197 = vadd.f32 %v1181, %v1189
      %v1198 = vadd.f32 %v1182, %v1190
      %v1199 = vadd.f32 %v1183, %v1191
      %v1200 = vadd.f32 %v1184, %v1192
      %v1209 = vrot.slane %v1194, 7
      %v1210 = vsel %vm201, %v1209, %v1193
      %v1211 = vrot.slane %v1195, 6
      %v1212 = vsel %vm204, %v1211, %v1210
      %v1213 = vrot.slane %v1196, 5
      %v1214 = vsel %vm207, %v1213, %v1212
      %v1215 = vrot.slane %v1197, 4
      %v1216 = vsel %vm210, %v1215, %v1214
      %v1217 = vrot.slane %v1198, 3
      %v1218 = vsel %vm213, %v1217, %v1216
      %v1219 = vrot.slane %v1199, 2
      %v1220 = vsel %vm216, %v1219, %v1218
      %v1221 = vrot.slane %v1200, 1
      %v1222 = vsel %vm219, %v1221, %v1220
      %v1223 = vsel %vm221, %v1222, 0
      %1225 = vmatprep.subr.mxu0 0.0
      %1226 = vmatpush1.msra.mxu0 %v150
      %1227 = vmatprep.subr.mxu0 0.0
      %1228 = vmatpush1.msra.mxu0 %v151
      %1229 = vmatprep.subr.mxu0 0.0
      %1230 = vmatpush1.msra.mxu0 0.0
      %1231 = vmatprep.subr.mxu0 0.0
      %1232 = vmatpush1.msra.mxu0 0.0
      %1233 = vmatprep.subr.mxu0 0.0
      %1234 = vmatpush1.msra.mxu0 0.0
      %1235 = vmatprep.subr.mxu0 0.0
      %1236 = vmatpush1.msra.mxu0 0.0
      %1237 = vmatprep.subr.mxu0 0.0
      %1238 = vmatpush1.msra.mxu0 0.0
      %1239 = vmatprep.subr.mxu0 0.0
      %1240 = vmatpush1.msra.mxu0 0.0
      %1241 = vmatprep.subr.mxu0 0.0
      %1242 = vmatpush1.msra.mxu0 0.0
      %1243 = vmatprep.subr.mxu0 0.0
      %1244 = vmatpush1.msra.mxu0 0.0
      %1245 = vmatprep.subr.mxu0 0.0
      %1246 = vmatpush1.msra.mxu0 0.0
      %1247 = vmatprep.subr.mxu0 0.0
      %1248 = vmatpush1.msra.mxu0 0.0
      %1249 = vmatprep.subr.mxu0 0.0
      %1250 = vmatpush1.msra.mxu0 0.0
      %1251 = vmatprep.subr.mxu0 0.0
      %1252 = vmatpush1.msra.mxu0 0.0
      %1253 = vmatprep.subr.mxu0 0.0
      %1254 = vmatpush1.msra.mxu0 0.0
      %1255 = vmatprep.subr.mxu0 0.0
      %1256 = vmatpush1.msra.mxu0 0.0
      %1257 = vmatprep.subr.mxu0 0.0
      %1258 = vmatpush1.msra.mxu0 0.0
      %1259 = vmatprep.subr.mxu0 0.0
      %1260 = vmatpush1.msra.mxu0 0.0
      %1261 = vmatprep.subr.mxu0 0.0
      %1262 = vmatpush1.msra.mxu0 0.0
      %1263 = vmatprep.subr.mxu0 0.0
      %1264 = vmatpush1.msra.mxu0 0.0
      %1265 = vmatprep.subr.mxu0 0.0
      %1266 = vmatpush1.msra.mxu0 0.0
      %1267 = vmatprep.subr.mxu0 0.0
      %1268 = vmatpush1.msra.mxu0 0.0
      %1269 = vmatprep.subr.mxu0 0.0
      %1270 = vmatpush1.msra.mxu0 0.0
      %1271 = vmatprep.subr.mxu0 0.0
      %1272 = vmatpush1.msra.mxu0 0.0
      %1273 = vmatprep.subr.mxu0 0.0
      %1274 = vmatpush1.msra.mxu0 0.0
      %1275 = vmatprep.subr.mxu0 0.0
      %1276 = vmatpush1.msra.mxu0 0.0
      %1277 = vmatprep.subr.mxu0 0.0
      %1278 = vmatpush1.msra.mxu0 0.0
      %1279 = vmatprep.subr.mxu0 0.0
      %1280 = vmatpush1.msra.mxu0 0.0
      %1281 = vmatprep.subr.mxu0 0.0
      %1282 = vmatpush1.msra.mxu0 0.0
      %1283 = vmatprep.subr.mxu0 0.0
      %1284 = vmatpush1.msra.mxu0 0.0
      %1285 = vmatprep.subr.mxu0 0.0
      %1286 = vmatpush1.msra.mxu0 0.0
      %1287 = vmatprep.subr.mxu0 0.0
      %1288 = vmatpush1.msra.mxu0 0.0
      %1289 = vmatprep.mubr.f32.mxu0 0.0
      %1290 = vmatmul.mubr.f32.gmra.mrb[0].mxu0 %v1223
      %v1291 = vpop.f32.mrb[0].mxu0
      %v1292 = vadd.f32 0.0, %v1291
      %v1293 = vpop.f32.mrb[0].mxu0
      %1294 = vdwg.mxu0
      %v1296 = vcombine.high %v1292, %v1292
      %v1298 = vunpack.c.l.s4 1966171168
      %v1299 = vunpack.c.0.s8 %v1298
      %v1300 = vlaneseq
      %v1301 = vshrl.u32 %v1300, 7
      %v1302 = vsub.s32 %v1299, %v1301
      %v1303 = vrot.slane %v1292, %v1302
      %v1305 = vunpack.c.l.s4 1966171168
      %v1306 = vunpack.c.0.s8 %v1305
      %v1307 = vlaneseq
      %v1308 = vshrl.u32 %v1307, 7
      %v1309 = vsub.s32 %v1306, %v1308
      %v1310 = vrot.slane %v1296, %v1309
      %v1311 = vcombine.high %v1303, %v1303
      %v1312 = vcombine.high %v1310, %v1310
      %v1314 = vunpack.c.l.s4 1966171168
      %v1315 = vunpack.c.0.s8 %v1314
      %v1316 = vlaneseq
      %v1317 = vshrl.u32 %v1316, 7
      %v1318 = vsub.s32 %v1315, %v1317
      %v1319 = vrot.slane %v1303, %v1318
      %v1321 = vunpack.c.l.s4 1966171168
      %v1322 = vunpack.c.0.s8 %v1321
      %v1323 = vlaneseq
      %v1324 = vshrl.u32 %v1323, 7
      %v1325 = vsub.s32 %v1322, %v1324
      %v1326 = vrot.slane %v1310, %v1325
      %v1328 = vunpack.c.l.s4 1966171168
      %v1329 = vunpack.c.0.s8 %v1328
      %v1330 = vlaneseq
      %v1331 = vshrl.u32 %v1330, 7
      %v1332 = vsub.s32 %v1329, %v1331
      %v1333 = vrot.slane %v1311, %v1332
      %v1335 = vunpack.c.l.s4 1966171168
      %v1336 = vunpack.c.0.s8 %v1335
      %v1337 = vlaneseq
      %v1338 = vshrl.u32 %v1337, 7
      %v1339 = vsub.s32 %v1336, %v1338
      %v1340 = vrot.slane %v1312, %v1339
      %v1341 = vcombine.high %v1319, %v1319
      %v1342 = vcombine.high %v1326, %v1326
      %v1343 = vcombine.high %v1333, %v1333
      %v1344 = vcombine.high %v1340, %v1340
      %1353 = vst.msk [vmem:[%s148 + $0x5] sm:$0x1] %vm352, %v1319
      %1354 = vst.msk [vmem:[%s148 + $0xd] sm:$0x1] %vm352, %v1333
      %1355 = vst.msk [vmem:[%s148 + $0x15] sm:$0x1] %vm352, %v1341
      %1356 = vst.msk [vmem:[%s148 + $0x1d] sm:$0x1] %vm352, %v1343
      %1357 = vst.msk [vmem:[%s148 + $0x25] sm:$0x1] %vm352, %v1326
      %1358 = vst.msk [vmem:[%s148 + $0x2d] sm:$0x1] %vm352, %v1340
      %1359 = vst.msk [vmem:[%s148 + $0x35] sm:$0x1] %vm352, %v1342
      %1360 = vst.msk [vmem:[%s148 + $0x3d] sm:$0x1] %vm352, %v1344
      %v1361 = vld [vmem:[%s142 + $0xc] sm:$0x1]
      %v1362 = vld [vmem:[%s142 + $0x1c] sm:$0x1]
      %v1363 = vld [vmem:[%s142 + $0x2c] sm:$0x1]
      %v1364 = vld [vmem:[%s142 + $0x3c] sm:$0x1]
      %v1365 = vld [vmem:[%s142 + $0x4c] sm:$0x1]
      %v1366 = vld [vmem:[%s142 + $0x5c] sm:$0x1]
      %v1367 = vld [vmem:[%s142 + $0x6c] sm:$0x1]
      %v1368 = vld [vmem:[%s142 + $0x7c] sm:$0x1]
      %v1369 = vld [vmem:[%s142 + $0xd] sm:$0x1]
      %v1370 = vld [vmem:[%s142 + $0x1d] sm:$0x1]
      %v1371 = vld [vmem:[%s142 + $0x2d] sm:$0x1]
      %v1372 = vld [vmem:[%s142 + $0x3d] sm:$0x1]
      %v1373 = vld [vmem:[%s142 + $0x4d] sm:$0x1]
      %v1374 = vld [vmem:[%s142 + $0x5d] sm:$0x1]
      %v1375 = vld [vmem:[%s142 + $0x6d] sm:$0x1]
      %v1376 = vld [vmem:[%s142 + $0x7d] sm:$0x1]
      %v1377 = vmul.f32 %v1361, 0.5
      %v1378 = vmul.f32 %v1362, 0.5
      %v1379 = vmul.f32 %v1363, 0.5
      %v1380 = vmul.f32 %v1364, 0.5
      %v1381 = vmul.f32 %v1365, 0.5
      %v1382 = vmul.f32 %v1366, 0.5
      %v1383 = vmul.f32 %v1367, 0.5
      %v1384 = vmul.f32 %v1368, 0.5
      %v1385 = vmul.f32 %v1369, 0.5
      %v1386 = vmul.f32 %v1370, 0.5
      %v1387 = vmul.f32 %v1371, 0.5
      %v1388 = vmul.f32 %v1372, 0.5
      %v1389 = vmul.f32 %v1373, 0.5
      %v1390 = vmul.f32 %v1374, 0.5
      %v1391 = vmul.f32 %v1375, 0.5
      %v1392 = vmul.f32 %v1376, 0.5
      %v1393 = vadd.f32 %v1377, %v1385
      %v1394 = vadd.f32 %v1378, %v1386
      %v1395 = vadd.f32 %v1379, %v1387
      %v1396 = vadd.f32 %v1380, %v1388
      %v1397 = vadd.f32 %v1381, %v1389
      %v1398 = vadd.f32 %v1382, %v1390
      %v1399 = vadd.f32 %v1383, %v1391
      %v1400 = vadd.f32 %v1384, %v1392
      %v1409 = vrot.slane %v1394, 7
      %v1410 = vsel %vm201, %v1409, %v1393
      %v1411 = vrot.slane %v1395, 6
      %v1412 = vsel %vm204, %v1411, %v1410
      %v1413 = vrot.slane %v1396, 5
      %v1414 = vsel %vm207, %v1413, %v1412
      %v1415 = vrot.slane %v1397, 4
      %v1416 = vsel %vm210, %v1415, %v1414
      %v1417 = vrot.slane %v1398, 3
      %v1418 = vsel %vm213, %v1417, %v1416
      %v1419 = vrot.slane %v1399, 2
      %v1420 = vsel %vm216, %v1419, %v1418
      %v1421 = vrot.slane %v1400, 1
      %v1422 = vsel %vm219, %v1421, %v1420
      %v1423 = vsel %vm221, %v1422, 0
      %1425 = vmatprep.subr.mxu0 0.0
      %1426 = vmatpush1.msra.mxu0 %v150
      %1427 = vmatprep.subr.mxu0 0.0
      %1428 = vmatpush1.msra.mxu0 %v151
      %1429 = vmatprep.subr.mxu0 0.0
      %1430 = vmatpush1.msra.mxu0 0.0
      %1431 = vmatprep.subr.mxu0 0.0
      %1432 = vmatpush1.msra.mxu0 0.0
      %1433 = vmatprep.subr.mxu0 0.0
      %1434 = vmatpush1.msra.mxu0 0.0
      %1435 = vmatprep.subr.mxu0 0.0
      %1436 = vmatpush1.msra.mxu0 0.0
      %1437 = vmatprep.subr.mxu0 0.0
      %1438 = vmatpush1.msra.mxu0 0.0
      %1439 = vmatprep.subr.mxu0 0.0
      %1440 = vmatpush1.msra.mxu0 0.0
      %1441 = vmatprep.subr.mxu0 0.0
      %1442 = vmatpush1.msra.mxu0 0.0
      %1443 = vmatprep.subr.mxu0 0.0
      %1444 = vmatpush1.msra.mxu0 0.0
      %1445 = vmatprep.subr.mxu0 0.0
      %1446 = vmatpush1.msra.mxu0 0.0
      %1447 = vmatprep.subr.mxu0 0.0
      %1448 = vmatpush1.msra.mxu0 0.0
      %1449 = vmatprep.subr.mxu0 0.0
      %1450 = vmatpush1.msra.mxu0 0.0
      %1451 = vmatprep.subr.mxu0 0.0
      %1452 = vmatpush1.msra.mxu0 0.0
      %1453 = vmatprep.subr.mxu0 0.0
      %1454 = vmatpush1.msra.mxu0 0.0
      %1455 = vmatprep.subr.mxu0 0.0
      %1456 = vmatpush1.msra.mxu0 0.0
      %1457 = vmatprep.subr.mxu0 0.0
      %1458 = vmatpush1.msra.mxu0 0.0
      %1459 = vmatprep.subr.mxu0 0.0
      %1460 = vmatpush1.msra.mxu0 0.0
      %1461 = vmatprep.subr.mxu0 0.0
      %1462 = vmatpush1.msra.mxu0 0.0
      %1463 = vmatprep.subr.mxu0 0.0
      %1464 = vmatpush1.msra.mxu0 0.0
      %1465 = vmatprep.subr.mxu0 0.0
      %1466 = vmatpush1.msra.mxu0 0.0
      %1467 = vmatprep.subr.mxu0 0.0
      %1468 = vmatpush1.msra.mxu0 0.0
      %1469 = vmatprep.subr.mxu0 0.0
      %1470 = vmatpush1.msra.mxu0 0.0
      %1471 = vmatprep.subr.mxu0 0.0
      %1472 = vmatpush1.msra.mxu0 0.0
      %1473 = vmatprep.subr.mxu0 0.0
      %1474 = vmatpush1.msra.mxu0 0.0
      %1475 = vmatprep.subr.mxu0 0.0
      %1476 = vmatpush1.msra.mxu0 0.0
      %1477 = vmatprep.subr.mxu0 0.0
      %1478 = vmatpush1.msra.mxu0 0.0
      %1479 = vmatprep.subr.mxu0 0.0
      %1480 = vmatpush1.msra.mxu0 0.0
      %1481 = vmatprep.subr.mxu0 0.0
      %1482 = vmatpush1.msra.mxu0 0.0
      %1483 = vmatprep.subr.mxu0 0.0
      %1484 = vmatpush1.msra.mxu0 0.0
      %1485 = vmatprep.subr.mxu0 0.0
      %1486 = vmatpush1.msra.mxu0 0.0
      %1487 = vmatprep.subr.mxu0 0.0
      %1488 = vmatpush1.msra.mxu0 0.0
      %1489 = vmatprep.mubr.f32.mxu0 0.0
      %1490 = vmatmul.mubr.f32.gmra.mrb[0].mxu0 %v1423
      %v1491 = vpop.f32.mrb[0].mxu0
      %v1492 = vadd.f32 0.0, %v1491
      %v1493 = vpop.f32.mrb[0].mxu0
      %1494 = vdwg.mxu0
      %v1496 = vcombine.high %v1492, %v1492
      %v1498 = vunpack.c.l.s4 1966171168
      %v1499 = vunpack.c.0.s8 %v1498
      %v1500 = vlaneseq
      %v1501 = vshrl.u32 %v1500, 7
      %v1502 = vsub.s32 %v1499, %v1501
      %v1503 = vrot.slane %v1492, %v1502
      %v1505 = vunpack.c.l.s4 1966171168
      %v1506 = vunpack.c.0.s8 %v1505
      %v1507 = vlaneseq
      %v1508 = vshrl.u32 %v1507, 7
      %v1509 = vsub.s32 %v1506, %v1508
      %v1510 = vrot.slane %v1496, %v1509
      %v1511 = vcombine.high %v1503, %v1503
      %v1512 = vcombine.high %v1510, %v1510
      %v1514 = vunpack.c.l.s4 1966171168
      %v1515 = vunpack.c.0.s8 %v1514
      %v1516 = vlaneseq
      %v1517 = vshrl.u32 %v1516, 7
      %v1518 = vsub.s32 %v1515, %v1517
      %v1519 = vrot.slane %v1503, %v1518
      %v1521 = vunpack.c.l.s4 1966171168
      %v1522 = vunpack.c.0.s8 %v1521
      %v1523 = vlaneseq
      %v1524 = vshrl.u32 %v1523, 7
      %v1525 = vsub.s32 %v1522, %v1524
      %v1526 = vrot.slane %v1510, %v1525
      %v1528 = vunpack.c.l.s4 1966171168
      %v1529 = vunpack.c.0.s8 %v1528
      %v1530 = vlaneseq
      %v1531 = vshrl.u32 %v1530, 7
      %v1532 = vsub.s32 %v1529, %v1531
      %v1533 = vrot.slane %v1511, %v1532
      %v1535 = vunpack.c.l.s4 1966171168
      %v1536 = vunpack.c.0.s8 %v1535
      %v1537 = vlaneseq
      %v1538 = vshrl.u32 %v1537, 7
      %v1539 = vsub.s32 %v1536, %v1538
      %v1540 = vrot.slane %v1512, %v1539
      %v1541 = vcombine.high %v1519, %v1519
      %v1542 = vcombine.high %v1526, %v1526
      %v1543 = vcombine.high %v1533, %v1533
      %v1544 = vcombine.high %v1540, %v1540
      %1553 = vst.msk [vmem:[%s148 + $0x6] sm:$0x1] %vm352, %v1519
      %1554 = vst.msk [vmem:[%s148 + $0xe] sm:$0x1] %vm352, %v1533
      %1555 = vst.msk [vmem:[%s148 + $0x16] sm:$0x1] %vm352, %v1541
      %1556 = vst.msk [vmem:[%s148 + $0x1e] sm:$0x1] %vm352, %v1543
      %1557 = vst.msk [vmem:[%s148 + $0x26] sm:$0x1] %vm352, %v1526
      %1558 = vst.msk [vmem:[%s148 + $0x2e] sm:$0x1] %vm352, %v1540
      %1559 = vst.msk [vmem:[%s148 + $0x36] sm:$0x1] %vm352, %v1542
      %1560 = vst.msk [vmem:[%s148 + $0x3e] sm:$0x1] %vm352, %v1544
      %v1561 = vld [vmem:[%s142 + $0xe] sm:$0x1]
      %v1562 = vld [vmem:[%s142 + $0x1e] sm:$0x1]
      %v1563 = vld [vmem:[%s142 + $0x2e] sm:$0x1]
      %v1564 = vld [vmem:[%s142 + $0x3e] sm:$0x1]
      %v1565 = vld [vmem:[%s142 + $0x4e] sm:$0x1]
      %v1566 = vld [vmem:[%s142 + $0x5e] sm:$0x1]
      %v1567 = vld [vmem:[%s142 + $0x6e] sm:$0x1]
      %v1568 = vld [vmem:[%s142 + $0x7e] sm:$0x1]
      %v1569 = vld [vmem:[%s142 + $0xf] sm:$0x1]
      %v1570 = vld [vmem:[%s142 + $0x1f] sm:$0x1]
      %v1571 = vld [vmem:[%s142 + $0x2f] sm:$0x1]
      %v1572 = vld [vmem:[%s142 + $0x3f] sm:$0x1]
      %v1573 = vld [vmem:[%s142 + $0x4f] sm:$0x1]
      %v1574 = vld [vmem:[%s142 + $0x5f] sm:$0x1]
      %v1575 = vld [vmem:[%s142 + $0x6f] sm:$0x1]
      %v1576 = vld [vmem:[%s142 + $0x7f] sm:$0x1]
      %v1577 = vmul.f32 %v1561, 0.5
      %v1578 = vmul.f32 %v1562, 0.5
      %v1579 = vmul.f32 %v1563, 0.5
      %v1580 = vmul.f32 %v1564, 0.5
      %v1581 = vmul.f32 %v1565, 0.5
      %v1582 = vmul.f32 %v1566, 0.5
      %v1583 = vmul.f32 %v1567, 0.5
      %v1584 = vmul.f32 %v1568, 0.5
      %v1585 = vmul.f32 %v1569, 0.5
      %v1586 = vmul.f32 %v1570, 0.5
      %v1587 = vmul.f32 %v1571, 0.5
      %v1588 = vmul.f32 %v1572, 0.5
      %v1589 = vmul.f32 %v1573, 0.5
      %v1590 = vmul.f32 %v1574, 0.5
      %v1591 = vmul.f32 %v1575, 0.5
      %v1592 = vmul.f32 %v1576, 0.5
      %v1593 = vadd.f32 %v1577, %v1585
      %v1594 = vadd.f32 %v1578, %v1586
      %v1595 = vadd.f32 %v1579, %v1587
      %v1596 = vadd.f32 %v1580, %v1588
      %v1597 = vadd.f32 %v1581, %v1589
      %v1598 = vadd.f32 %v1582, %v1590
      %v1599 = vadd.f32 %v1583, %v1591
      %v1600 = vadd.f32 %v1584, %v1592
      %v1609 = vrot.slane %v1594, 7
      %v1610 = vsel %vm201, %v1609, %v1593
      %v1611 = vrot.slane %v1595, 6
      %v1612 = vsel %vm204, %v1611, %v1610
      %v1613 = vrot.slane %v1596, 5
      %v1614 = vsel %vm207, %v1613, %v1612
      %v1615 = vrot.slane %v1597, 4
      %v1616 = vsel %vm210, %v1615, %v1614
      %v1617 = vrot.slane %v1598, 3
      %v1618 = vsel %vm213, %v1617, %v1616
      %v1619 = vrot.slane %v1599, 2
      %v1620 = vsel %vm216, %v1619, %v1618
      %v1621 = vrot.slane %v1600, 1
      %v1622 = vsel %vm219, %v1621, %v1620
      %v1623 = vsel %vm221, %v1622, 0
      %1625 = vmatprep.subr.mxu0 0.0
      %1626 = vmatpush1.msra.mxu0 %v150
      %1627 = vmatprep.subr.mxu0 0.0
      %1628 = vmatpush1.msra.mxu0 %v151
      %1629 = vmatprep.subr.mxu0 0.0
      %1630 = vmatpush1.msra.mxu0 0.0
      %1631 = vmatprep.subr.mxu0 0.0
      %1632 = vmatpush1.msra.mxu0 0.0
      %1633 = vmatprep.subr.mxu0 0.0
      %1634 = vmatpush1.msra.mxu0 0.0
      %1635 = vmatprep.subr.mxu0 0.0
      %1636 = vmatpush1.msra.mxu0 0.0
      %1637 = vmatprep.subr.mxu0 0.0
      %1638 = vmatpush1.msra.mxu0 0.0
      %1639 = vmatprep.subr.mxu0 0.0
      %1640 = vmatpush1.msra.mxu0 0.0
      %1641 = vmatprep.subr.mxu0 0.0
      %1642 = vmatpush1.msra.mxu0 0.0
      %1643 = vmatprep.subr.mxu0 0.0
      %1644 = vmatpush1.msra.mxu0 0.0
      %1645 = vmatprep.subr.mxu0 0.0
      %1646 = vmatpush1.msra.mxu0 0.0
      %1647 = vmatprep.subr.mxu0 0.0
      %1648 = vmatpush1.msra.mxu0 0.0
      %1649 = vmatprep.subr.mxu0 0.0
      %1650 = vmatpush1.msra.mxu0 0.0
      %1651 = vmatprep.subr.mxu0 0.0
      %1652 = vmatpush1.msra.mxu0 0.0
      %1653 = vmatprep.subr.mxu0 0.0
      %1654 = vmatpush1.msra.mxu0 0.0
      %1655 = vmatprep.subr.mxu0 0.0
      %1656 = vmatpush1.msra.mxu0 0.0
      %1657 = vmatprep.subr.mxu0 0.0
      %1658 = vmatpush1.msra.mxu0 0.0
      %1659 = vmatprep.subr.mxu0 0.0
      %1660 = vmatpush1.msra.mxu0 0.0
      %1661 = vmatprep.subr.mxu0 0.0
      %1662 = vmatpush1.msra.mxu0 0.0
      %1663 = vmatprep.subr.mxu0 0.0
      %1664 = vmatpush1.msra.mxu0 0.0
      %1665 = vmatprep.subr.mxu0 0.0
      %1666 = vmatpush1.msra.mxu0 0.0
      %1667 = vmatprep.subr.mxu0 0.0
      %1668 = vmatpush1.msra.mxu0 0.0
      %1669 = vmatprep.subr.mxu0 0.0
      %1670 = vmatpush1.msra.mxu0 0.0
      %1671 = vmatprep.subr.mxu0 0.0
      %1672 = vmatpush1.msra.mxu0 0.0
      %1673 = vmatprep.subr.mxu0 0.0
      %1674 = vmatpush1.msra.mxu0 0.0
      %1675 = vmatprep.subr.mxu0 0.0
      %1676 = vmatpush1.msra.mxu0 0.0
      %1677 = vmatprep.subr.mxu0 0.0
      %1678 = vmatpush1.msra.mxu0 0.0
      %1679 = vmatprep.subr.mxu0 0.0
      %1680 = vmatpush1.msra.mxu0 0.0
      %1681 = vmatprep.subr.mxu0 0.0
      %1682 = vmatpush1.msra.mxu0 0.0
      %1683 = vmatprep.subr.mxu0 0.0
      %1684 = vmatpush1.msra.mxu0 0.0
      %1685 = vmatprep.subr.mxu0 0.0
      %1686 = vmatpush1.msra.mxu0 0.0
      %1687 = vmatprep.subr.mxu0 0.0
      %1688 = vmatpush1.msra.mxu0 0.0
      %1689 = vmatprep.mubr.f32.mxu0 0.0
      %1690 = vmatmul.mubr.f32.gmra.mrb[0].mxu0 %v1623
      %v1691 = vpop.f32.mrb[0].mxu0
      %v1692 = vadd.f32 0.0, %v1691
      %v1693 = vpop.f32.mrb[0].mxu0
      %1694 = vdwg.mxu0
      %v1696 = vcombine.high %v1692, %v1692
      %v1698 = vunpack.c.l.s4 1966171168
      %v1699 = vunpack.c.0.s8 %v1698
      %v1700 = vlaneseq
      %v1701 = vshrl.u32 %v1700, 7
      %v1702 = vsub.s32 %v1699, %v1701
      %v1703 = vrot.slane %v1692, %v1702
      %v1705 = vunpack.c.l.s4 1966171168
      %v1706 = vunpack.c.0.s8 %v1705
      %v1707 = vlaneseq
      %v1708 = vshrl.u32 %v1707, 7
      %v1709 = vsub.s32 %v1706, %v1708
      %v1710 = vrot.slane %v1696, %v1709
      %v1711 = vcombine.high %v1703, %v1703
      %v1712 = vcombine.high %v1710, %v1710
      %v1714 = vunpack.c.l.s4 1966171168
      %v1715 = vunpack.c.0.s8 %v1714
      %v1716 = vlaneseq
      %v1717 = vshrl.u32 %v1716, 7
      %v1718 = vsub.s32 %v1715, %v1717
      %v1719 = vrot.slane %v1703, %v1718
      %v1721 = vunpack.c.l.s4 1966171168
      %v1722 = vunpack.c.0.s8 %v1721
      %v1723 = vlaneseq
      %v1724 = vshrl.u32 %v1723, 7
      %v1725 = vsub.s32 %v1722, %v1724
      %v1726 = vrot.slane %v1710, %v1725
      %v1728 = vunpack.c.l.s4 1966171168
      %v1729 = vunpack.c.0.s8 %v1728
      %v1730 = vlaneseq
      %v1731 = vshrl.u32 %v1730, 7
      %v1732 = vsub.s32 %v1729, %v1731
      %v1733 = vrot.slane %v1711, %v1732
      %v1735 = vunpack.c.l.s4 1966171168
      %v1736 = vunpack.c.0.s8 %v1735
      %v1737 = vlaneseq
      %v1738 = vshrl.u32 %v1737, 7
      %v1739 = vsub.s32 %v1736, %v1738
      %v1740 = vrot.slane %v1712, %v1739
      %v1741 = vcombine.high %v1719, %v1719
      %v1742 = vcombine.high %v1726, %v1726
      %v1743 = vcombine.high %v1733, %v1733
      %v1744 = vcombine.high %v1740, %v1740
      %1753 = vst.msk [vmem:[%s148 + $0x7] sm:$0x1] %vm352, %v1719
      %1754 = vst.msk [vmem:[%s148 + $0xf] sm:$0x1] %vm352, %v1733
      %1755 = vst.msk [vmem:[%s148 + $0x17] sm:$0x1] %vm352, %v1741
      %1756 = vst.msk [vmem:[%s148 + $0x1f] sm:$0x1] %vm352, %v1743
      %1757 = vst.msk [vmem:[%s148 + $0x27] sm:$0x1] %vm352, %v1726
      %1758 = vst.msk [vmem:[%s148 + $0x2f] sm:$0x1] %vm352, %v1740
      %1759 = vst.msk [vmem:[%s148 + $0x37] sm:$0x1] %vm352, %v1742
      %1760 = vst.msk [vmem:[%s148 + $0x3f] sm:$0x1] %vm352, %v1744
      %s1761 = smul.u32 8, %s13
      %p1762 = scmp.lt.s32.totalorder %s1761, 15
      %s1763 = scalar_select %p1762, %s1761, 15
      %s1764 = smul.addr %s1763, 8
      %s1765 = scalar_lea.vmem %s2, %s1764
      // Predicated region
      $region29: #{up_or_down_sampling_effect.1} parent=27 // pred_check
        %p1766 = pneg %p78
      $region30: #{up_or_down_sampling_effect.1} parent=27 // pred_check_branch
        %1768 = sbr.rel (%p1766) target = $region32
      $region31: #{up_or_down_sampling_effect.1} parent=27 // pred_region
        %s1769 = smul.u32 8, %s13
      $region32: #{up_or_down_sampling_effect.1} parent=27 // pred_fallthru
        _
    $region28: #{up_or_down_sampling_effect.1} parent=5 // pred_fallthru
      _
    %p1770 = scmp.le.s32.totalorder 2, %s8
    // Predicated region
    $region33: #{up_or_down_sampling_effect.1} parent=5 // pred_check
      %p1771 = pneg %p1770
    $region34: #{up_or_down_sampling_effect.1} parent=5 // pred_check_branch
      %1773 = sbr.rel (%p1771) target = $region36
    $region35: #{up_or_down_sampling_effect.1} parent=5 // pred_region
      %s1774 = ssub.s32 %s8, 2
      // Predicated region
      $region37: #{up_or_down_sampling_effect.1} parent=35 // pred_check
        %p1775 = pneg %p84
      $region38: #{up_or_down_sampling_effect.1} parent=35 // pred_check_branch
        %1777 = sbr.rel (%p1775) target = $region40
      $region39: #{up_or_down_sampling_effect.1} parent=35 // pred_region
        %s1778 = smul.u32 8, %s14
        %p1779 = scmp.lt.s32.totalorder %s1778, 15
        %s1780 = scalar_select %p1779, %s1778, 15
        %s1781 = smul.addr %s1780, 8
        %s1782 = scalar_lea.vmem %s2, %s1781
      $region40: #{up_or_down_sampling_effect.1} parent=35 // pred_fallthru
        _
    $region36: #{up_or_down_sampling_effect.1} parent=5 // pred_fallthru
      _
  $region6: #{up_or_down_sampling_effect.1} parent=0 // loop_footer
    %s12 = sadd.s32 1, %s8
  $region7: #{up_or_down_sampling_effect.1} parent=0 // loop_footer_branch
    %7 = sbr.rel target = $region3
  $region8: #{up_or_down_sampling_effect.1} parent=0 // loop_exit
    _

</llo_original>
